<compile_context>
chip_gen: v7x
topology: tpu7x:2x2x1
jax: 0.10.0
libtpu: 0.0.40
codegen_flags: <defaults>
</compile_context>

<pallas_src>
import jax
import jax.numpy as jnp
from jax.experimental import pallas as pl
from jax.experimental.pallas import tpu as pltpu


# ------------------------------------------------------------------ fused kernel

def _network_kernel(x_ref, xrev_ref,
                    wih0_ref, whh0_ref, bgx0_ref, bhn0_ref,
                    wih1_ref, whh1_ref, bgx1_ref, bhn1_ref,
                    lw_ref, lb_ref, out_ref):
    """Fused 2-layer bidirectional GRU + linear + sigmoid (all float32).

    x_ref / xrev_ref : (T, D0)        input rows, forward and time-reversed
    wihL_ref         : (2, D, 6H)     [0]=fwd-stream weights, [1]=bwd-stream weights,
                                      zero-padded into the fused column layout
    whhL_ref         : (2H, 6H)       block-diagonal recurrent weight (both directions)
    bgxL_ref         : (1, 6H)        folded input-side biases (b_ih+b_hh for r,z; b_ih for n)
    bhnL_ref         : (1, 2H)        b_hh_n per direction (added inside r * (.))
    lw_ref           : (O, H)   lb_ref: (O, 1)   out_ref: (O, T)
    Fused column layout: [r_f | r_b | z_f | z_b | n_f | n_b], each block H lanes.
    """
    f32 = jnp.float32
    T = x_ref.shape[0]
    H2 = whh0_ref.shape[0]        # 2H
    H = H2 // 2
    H4 = 4 * H

    def bigru_layer(xin, xin_rev, wih_ref, whh_ref, bgx_ref, bhn_ref):
        # Fused input projection for both directions, all gates, all timesteps.
        # Row s: fwd gates from input row s, bwd gates from input row T-1-s.
        # Dots adjacent, bias last (MRB accumulation on v7x).
        gx = (jnp.dot(xin, wih_ref[0], preferred_element_type=f32)
              + jnp.dot(xin_rev, wih_ref[1], preferred_element_type=f32)
              + bgx_ref[...])                                  # (T, 6H)
        gx_rz = gx[:, :H4]                                     # (T, 4H)  r|z, both dirs
        gx_n = gx[:, H4:]                                      # (T, 2H)  n, both dirs
        whh = whh_ref[...]                                     # (2H, 6H) hoisted
        bhn = bhn_ref[...]                                     # (1, 2H)

        h = jnp.zeros((1, H2), f32)                            # [h_fwd | h_bwd]
        outs = []
        # TODO(synk): if T grows beyond ~32, switch to lax.fori_loop(unroll=True) with a
        # pltpu.VMEM((T, 2H)) scratch instead of this fully-unrolled loop + concatenate.
        for s in range(T):
            # Single fused recurrent MXU dot per step (both directions, all 3 gates).
            gh = jnp.dot(h, whh, preferred_element_type=f32)   # (1, 6H)
            rz = jax.nn.sigmoid(gx_rz[s:s + 1] + gh[:, :H4])   # (1, 4H)
            r = rz[:, :H2]                                     # [r_f | r_b]
            z = rz[:, H2:]                                     # [z_f | z_b]
            n = jnp.tanh(gx_n[s:s + 1] + r * (gh[:, H4:] + bhn))
            h = (1.0 - z) * n + z * h
            outs.append(h)
        return outs                                            # T x (1, 2H), step order

    def assemble(outs):
        stacked = jnp.concatenate(outs, axis=0)                # (T, 2H) step order
        stacked_r = jnp.concatenate(outs[::-1], axis=0)        # reversed step order
        return stacked, stacked_r

    x = x_ref[...]                                             # (T, D0)
    x_rev = xrev_ref[...]

    # ---- layer 0 (bidirectional)
    outs0 = bigru_layer(x, x_rev, wih0_ref, whh0_ref, bgx0_ref, bhn0_ref)
    st0, st0r = assemble(outs0)
    # time-ordered output row t = [h_fwd(t) | h_bwd(t)] and its time reversal
    o0 = jnp.concatenate([st0[:, :H], st0r[:, H:]], axis=1)    # (T, 2H)
    o0_rev = jnp.concatenate([st0r[:, :H], st0[:, H:]], axis=1)
    # TODO(synk): nn.GRU dropout=0.5 between layers is training-only; inference is identity.

    # ---- layer 1 (bidirectional)
    outs1 = bigru_layer(o0, o0_rev, wih1_ref, whh1_ref, bgx1_ref, bhn1_ref)
    st1, st1r = assemble(outs1)

    # ---- head: r = fwd + bwd halves (time-ordered), then sigmoid(Linear(r))
    r_head = st1[:, :H] + st1r[:, H:]                          # (T, H)
    logits = jnp.dot(lw_ref[...], r_head.T,
                     preferred_element_type=f32) + lb_ref[...]  # (O, T) lane-dense
    out_ref[...] = jax.nn.sigmoid(logits)


# ------------------------------------------------------------------ wrapper

def _vmem():
    return pl.BlockSpec(memory_space=pltpu.MemorySpace.VMEM)


@jax.jit
def network_forward(x, kp):
    """x: (1, input_size, T), exactly like the PyTorch module's input."""
    assert x.shape[0] == 1, "l.view(l.size()[1]) in the reference forces B == 1"
    T = x.shape[2]
    O = kp["lin_w"].shape[0]
    assert O == 1, "l.view(l.size()[1]) requires output_size == 1"

    xt = jnp.transpose(x[0], (1, 0)).astype(jnp.float32)       # (T, input_size)
    xt_rev = xt[::-1]                                          # time-reversed (done in XLA)

    out = pl.pallas_call(
        _network_kernel,
        out_shape=jax.ShapeDtypeStruct((O, T), jnp.float32),
        in_specs=[_vmem()] * 12,
        out_specs=_vmem(),
    )(xt, xt_rev,
      kp["wih0"], kp["whh0"], kp["bgx0"], kp["bhn0"],
      kp["wih1"], kp["whh1"], kp["bgx1"], kp["bhn1"],
      kp["lin_w"], kp["lin_b"])

    return out.reshape(-1)                                     # (T,)


# ------------------------------------------------------------------ params

def init_params(key, input_size, hidden_size, output_size):
    """PyTorch-layout params with PyTorch-style init: U(-1/sqrt(H), 1/sqrt(H))."""
    H = hidden_size
    k = float(H) ** -0.5
    keys = iter(jax.random.split(key, 20))

    def u(shape):
        return jax.random.uniform(next(keys), shape, jnp.float32, -k, k)

    def gru_dir_params(in_dim):
        return (u((3 * H, in_dim)),   # weight_ih  [r|z|n]
                u((3 * H, H)),        # weight_hh
                u((3 * H,)),          # bias_ih
                u((3 * H,)))          # bias_hh

    return {
        "l0_fwd": gru_dir_params(input_size),
        "l0_bwd": gru_dir_params(input_size),
        "l1_fwd": gru_dir_params(2 * H),
        "l1_bwd": gru_dir_params(2 * H),
        "lin_w": u((output_size, H)),
        "lin_b": u((output_size,)),
    }


def prepare_params(params):
    """One-time conversion to the fused kernel layout.
    Fused column layout (6H wide): [r_f | r_b | z_f | z_b | n_f | n_b].
    Note (v5e): with H=32 the fused width is 6H=192, i.e. 2 MXU passes per recurrent step
    on v5e's 128-wide MXU but a single pass on v6e/v7x; for H >= 64 on v5e prefer a
    per-direction (H, 3H) fusion instead."""
    f32 = jnp.float32

    def dir_split(p):
        w_ih, w_hh, b_ih, b_hh = p
        H = w_hh.shape[1]
        wih = [w_ih[g * H:(g + 1) * H].T.astype(f32) for g in range(3)]   # (D, H) r,z,n
        whh = [w_hh[g * H:(g + 1) * H].T.astype(f32) for g in range(3)]   # (H, H)
        b_r = (b_ih[0:H] + b_hh[0:H]).astype(f32)            # reset: b_ih + b_hh folded
        b_z = (b_ih[H:2 * H] + b_hh[H:2 * H]).astype(f32)    # update: b_ih + b_hh folded
        b_in = b_ih[2 * H:3 * H].astype(f32)                 # new: b_ih_n
        b_hn = b_hh[2 * H:3 * H].astype(f32)                 # new: b_hh_n (inside r * (.))
        return wih, whh, (b_r, b_z, b_in, b_hn)

    def layer_pack(p_fwd, p_bwd):
        wf, hf, bf = dir_split(p_fwd)
        wb, hb, bb = dir_split(p_bwd)
        H = hf[0].shape[0]
        D = wf[0].shape[0]
        zD = jnp.zeros((D, H), f32)
        zH = jnp.zeros((H, H), f32)
        # input-side weights, zero-padded into the fused layout (zeros = free FLOPs here)
        wih_f6 = jnp.concatenate([wf[0], zD, wf[1], zD, wf[2], zD], axis=1)   # (D, 6H)
        wih_b6 = jnp.concatenate([zD, wb[0], zD, wb[1], zD, wb[2]], axis=1)   # (D, 6H)
        wih = jnp.stack([wih_f6, wih_b6])                                     # (2, D, 6H)
        # block-diagonal recurrent weight: rows 0:H act on h_fwd, rows H:2H on h_bwd
        whh_top = jnp.concatenate([hf[0], zH, hf[1], zH, hf[2], zH], axis=1)  # (H, 6H)
        whh_bot = jnp.concatenate([zH, hb[0], zH, hb[1], zH, hb[2]], axis=1)  # (H, 6H)
        whh = jnp.concatenate([whh_top, whh_bot], axis=0)                     # (2H, 6H)
        bgx = jnp.concatenate([bf[0], bb[0], bf[1], bb[1],
                               bf[2], bb[2]]).reshape(1, 6 * H)               # (1, 6H)
        bhn = jnp.concatenate([bf[3], bb[3]]).reshape(1, 2 * H)               # (1, 2H)
        return wih, whh, bgx, bhn

    wih0, whh0, bgx0, bhn0 = layer_pack(params["l0_fwd"], params["l0_bwd"])
    wih1, whh1, bgx1, bhn1 = layer_pack(params["l1_fwd"], params["l1_bwd"])
    return {
        "wih0": wih0, "whh0": whh0, "bgx0": bgx0, "bhn0": bhn0,
        "wih1": wih1, "whh1": whh1, "bgx1": bgx1, "bhn1": bhn1,
        "lin_w": params["lin_w"].astype(f32),                   # (O, H)
        "lin_b": params["lin_b"].reshape(-1, 1).astype(f32),    # (O, 1)
    }


# ------------------------------------------------------------------ pure-JAX reference

def reference_forward(x, params):
    """Straightforward f32 reference matching torch semantics (for verification)."""
    xt = jnp.transpose(x[0], (1, 0)).astype(jnp.float32)        # (T, D)

    def run_dir(seq, p):
        w_ih, w_hh, b_ih, b_hh = p
        H = w_hh.shape[1]
        h = jnp.zeros((H,), jnp.float32)
        outs = []
        for t in range(seq.shape[0]):
            gi = w_ih @ seq[t] + b_ih
            gh = w_hh @ h + b_hh
            r = jax.nn.sigmoid(gi[:H] + gh[:H])
            z = jax.nn.sigmoid(gi[H:2 * H] + gh[H:2 * H])
            n = jnp.tanh(gi[2 * H:] + r * gh[2 * H:])
            h = (1.0 - z) * n + z * h
            outs.append(h)
        return jnp.stack(outs)                                   # (T, H)

    def bidir(seq, pf, pb):
        f = run_dir(seq, pf)
        b = run_dir(seq[::-1], pb)[::-1]
        return jnp.concatenate([f, b], axis=1)                   # (T, 2H)

    H = params["l0_fwd"][1].shape[1]
    o0 = bidir(xt, params["l0_fwd"], params["l0_bwd"])
    o1 = bidir(o0, params["l1_fwd"], params["l1_bwd"])
    r = o1[:, :H] + o1[:, H:]
    logits = r @ params["lin_w"].T + params["lin_b"]
    return jax.nn.sigmoid(logits).reshape(-1)


# ------------------------------------------------------------------ main

if __name__ == "__main__":
    input_size, hidden_size, output_size = 16, 32, 1
    T = 8  # sequence length

    key = jax.random.PRNGKey(0)
    k_param, k_x = jax.random.split(key)

    params = init_params(k_param, input_size, hidden_size, output_size)
    kparams = prepare_params(params)           # one-time layout conversion
    x = jax.random.normal(k_x, (1, input_size, T), dtype=jnp.float32)

    out = network_forward(x, kparams)
    out = jax.block_until_ready(out)

    assert out.shape == (T,), out.shape
    assert bool(jnp.all(jnp.isfinite(out)))

    ref = reference_forward(x, params)
    max_err = float(jnp.max(jnp.abs(out - ref)))
    assert max_err < 5e-2, f"max abs error vs reference: {max_err}"

    print("KERNEL_OK")
</pallas_src>

<mosaic_0001>
module attributes {stable_mosaic.version = 11 : i64} {
  func.func @_network_kernel(%arg0: memref<8x16xf32, #tpu.memory_space<vmem>>, %arg1: memref<8x16xf32, #tpu.memory_space<vmem>>, %arg2: memref<2x16x192xf32, #tpu.memory_space<vmem>>, %arg3: memref<64x192xf32, #tpu.memory_space<vmem>>, %arg4: memref<1x192xf32, #tpu.memory_space<vmem>>, %arg5: memref<1x64xf32, #tpu.memory_space<vmem>>, %arg6: memref<2x64x192xf32, #tpu.memory_space<vmem>>, %arg7: memref<64x192xf32, #tpu.memory_space<vmem>>, %arg8: memref<1x192xf32, #tpu.memory_space<vmem>>, %arg9: memref<1x64xf32, #tpu.memory_space<vmem>>, %arg10: memref<1x32xf32, #tpu.memory_space<vmem>>, %arg11: memref<1x1xf32, #tpu.memory_space<vmem>>, %arg12: memref<1x8xf32, #tpu.memory_space<vmem>>) attributes {dimension_semantics = [], scalar_prefetch = 0 : i64, scratch_operands = 0 : i64, tpu.core_type = #tpu.core_type<tc>} {
    %c0 = arith.constant 0 : index
    %c0_0 = arith.constant 0 : index
    %0 = vector.load %arg0[%c0, %c0_0] : memref<8x16xf32, #tpu.memory_space<vmem>>, vector<8x16xf32>
    %c0_1 = arith.constant 0 : index
    %c0_2 = arith.constant 0 : index
    %1 = vector.load %arg1[%c0_1, %c0_2] : memref<8x16xf32, #tpu.memory_space<vmem>>, vector<8x16xf32>
    %c0_3 = arith.constant 0 : index
    %c0_4 = arith.constant 0 : index
    %c0_5 = arith.constant 0 : index
    %2 = vector.load %arg2[%c0_3, %c0_4, %c0_5] : memref<2x16x192xf32, #tpu.memory_space<vmem>>, vector<1x16x192xf32>
    %3 = vector.shape_cast %2 : vector<1x16x192xf32> to vector<16x192xf32>
    %cst = arith.constant dense<0.000000e+00> : vector<8x192xf32>
    %4 = tpu.matmul %0, %3, %cst {dimension_numbers = #tpu.dot_dimension_numbers<[1], [0], [0], [1], [0, 0, 1, 1], [], []>} : vector<8x16xf32>, vector<16x192xf32>, vector<8x192xf32> -> vector<8x192xf32>
    %c1 = arith.constant 1 : index
    %c0_6 = arith.constant 0 : index
    %c0_7 = arith.constant 0 : index
    %5 = vector.load %arg2[%c1, %c0_6, %c0_7] : memref<2x16x192xf32, #tpu.memory_space<vmem>>, vector<1x16x192xf32>
    %6 = vector.shape_cast %5 : vector<1x16x192xf32> to vector<16x192xf32>
    %cst_8 = arith.constant dense<0.000000e+00> : vector<8x192xf32>
    %7 = tpu.matmul %1, %6, %cst_8 {dimension_numbers = #tpu.dot_dimension_numbers<[1], [0], [0], [1], [0, 0, 1, 1], [], []>} : vector<8x16xf32>, vector<16x192xf32>, vector<8x192xf32> -> vector<8x192xf32>
    %8 = arith.addf %4, %7 : vector<8x192xf32>
    %c0_9 = arith.constant 0 : index
    %c0_10 = arith.constant 0 : index
    %9 = vector.load %arg4[%c0_9, %c0_10] : memref<1x192xf32, #tpu.memory_space<vmem>>, vector<1x192xf32>
    %10 = vector.broadcast %9 : vector<1x192xf32> to vector<8x192xf32>
    %11 = arith.addf %8, %10 : vector<8x192xf32>
    %12 = vector.extract_strided_slice %11 {offsets = [0, 0], sizes = [8, 128], strides = [1, 1]} : vector<8x192xf32> to vector<8x128xf32>
    %13 = vector.extract_strided_slice %11 {offsets = [0, 128], sizes = [8, 64], strides = [1, 1]} : vector<8x192xf32> to vector<8x64xf32>
    %c0_11 = arith.constant 0 : index
    %c0_12 = arith.constant 0 : index
    %14 = vector.load %arg3[%c0_11, %c0_12] : memref<64x192xf32, #tpu.memory_space<vmem>>, vector<64x192xf32>
    %c0_13 = arith.constant 0 : index
    %c0_14 = arith.constant 0 : index
    %15 = vector.load %arg5[%c0_13, %c0_14] : memref<1x64xf32, #tpu.memory_space<vmem>>, vector<1x64xf32>
    %cst_15 = arith.constant 0.000000e+00 : f32
    %16 = vector.broadcast %cst_15 : f32 to vector<1x64xf32>
    %cst_16 = arith.constant dense<0.000000e+00> : vector<1x192xf32>
    %17 = tpu.matmul %16, %14, %cst_16 {dimension_numbers = #tpu.dot_dimension_numbers<[1], [0], [0], [1], [0, 0, 1, 1], [], []>} : vector<1x64xf32>, vector<64x192xf32>, vector<1x192xf32> -> vector<1x192xf32>
    %18 = vector.extract_strided_slice %12 {offsets = [0, 0], sizes = [1, 128], strides = [1, 1]} : vector<8x128xf32> to vector<1x128xf32>
    %19 = vector.extract_strided_slice %17 {offsets = [0, 0], sizes = [1, 128], strides = [1, 1]} : vector<1x192xf32> to vector<1x128xf32>
    %20 = arith.addf %18, %19 : vector<1x128xf32>
    %21 = arith.negf %20 : vector<1x128xf32>
    %22 = math.exp %21 : vector<1x128xf32>
    %cst_17 = arith.constant 1.000000e+00 : f32
    %23 = vector.broadcast %cst_17 : f32 to vector<1x128xf32>
    %24 = arith.addf %23, %22 : vector<1x128xf32>
    %25 = arith.divf %23, %24 : vector<1x128xf32>
    %26 = vector.extract_strided_slice %25 {offsets = [0, 0], sizes = [1, 64], strides = [1, 1]} : vector<1x128xf32> to vector<1x64xf32>
    %27 = vector.extract_strided_slice %25 {offsets = [0, 64], sizes = [1, 64], strides = [1, 1]} : vector<1x128xf32> to vector<1x64xf32>
    %28 = vector.extract_strided_slice %13 {offsets = [0, 0], sizes = [1, 64], strides = [1, 1]} : vector<8x64xf32> to vector<1x64xf32>
    %29 = vector.extract_strided_slice %17 {offsets = [0, 128], sizes = [1, 64], strides = [1, 1]} : vector<1x192xf32> to vector<1x64xf32>
    %30 = arith.addf %29, %15 : vector<1x64xf32>
    %31 = arith.mulf %26, %30 : vector<1x64xf32>
    %32 = arith.addf %28, %31 : vector<1x64xf32>
    %33 = math.tanh %32 : vector<1x64xf32>
    %cst_18 = arith.constant 1.000000e+00 : f32
    %34 = vector.broadcast %cst_18 : f32 to vector<1x64xf32>
    %35 = arith.subf %34, %27 : vector<1x64xf32>
    %36 = arith.mulf %35, %33 : vector<1x64xf32>
    %37 = arith.mulf %27, %16 : vector<1x64xf32>
    %38 = arith.addf %36, %37 : vector<1x64xf32>
    %cst_19 = arith.constant dense<0.000000e+00> : vector<1x192xf32>
    %39 = tpu.matmul %38, %14, %cst_19 {dimension_numbers = #tpu.dot_dimension_numbers<[1], [0], [0], [1], [0, 0, 1, 1], [], []>} : vector<1x64xf32>, vector<64x192xf32>, vector<1x192xf32> -> vector<1x192xf32>
    %40 = vector.extract_strided_slice %12 {offsets = [1, 0], sizes = [1, 128], strides = [1, 1]} : vector<8x128xf32> to vector<1x128xf32>
    %41 = vector.extract_strided_slice %39 {offsets = [0, 0], sizes = [1, 128], strides = [1, 1]} : vector<1x192xf32> to vector<1x128xf32>
    %42 = arith.addf %40, %41 : vector<1x128xf32>
    %43 = arith.negf %42 : vector<1x128xf32>
    %44 = math.exp %43 : vector<1x128xf32>
    %cst_20 = arith.constant 1.000000e+00 : f32
    %45 = vector.broadcast %cst_20 : f32 to vector<1x128xf32>
    %46 = arith.addf %45, %44 : vector<1x128xf32>
    %47 = arith.divf %45, %46 : vector<1x128xf32>
    %48 = vector.extract_strided_slice %47 {offsets = [0, 0], sizes = [1, 64], strides = [1, 1]} : vector<1x128xf32> to vector<1x64xf32>
    %49 = vector.extract_strided_slice %47 {offsets = [0, 64], sizes = [1, 64], strides = [1, 1]} : vector<1x128xf32> to vector<1x64xf32>
    %50 = vector.extract_strided_slice %13 {offsets = [1, 0], sizes = [1, 64], strides = [1, 1]} : vector<8x64xf32> to vector<1x64xf32>
    %51 = vector.extract_strided_slice %39 {offsets = [0, 128], sizes = [1, 64], strides = [1, 1]} : vector<1x192xf32> to vector<1x64xf32>
    %52 = arith.addf %51, %15 : vector<1x64xf32>
    %53 = arith.mulf %48, %52 : vector<1x64xf32>
    %54 = arith.addf %50, %53 : vector<1x64xf32>
    %55 = math.tanh %54 : vector<1x64xf32>
    %cst_21 = arith.constant 1.000000e+00 : f32
    %56 = vector.broadcast %cst_21 : f32 to vector<1x64xf32>
    %57 = arith.subf %56, %49 : vector<1x64xf32>
    %58 = arith.mulf %57, %55 : vector<1x64xf32>
    %59 = arith.mulf %49, %38 : vector<1x64xf32>
    %60 = arith.addf %58, %59 : vector<1x64xf32>
    %cst_22 = arith.constant dense<0.000000e+00> : vector<1x192xf32>
    %61 = tpu.matmul %60, %14, %cst_22 {dimension_numbers = #tpu.dot_dimension_numbers<[1], [0], [0], [1], [0, 0, 1, 1], [], []>} : vector<1x64xf32>, vector<64x192xf32>, vector<1x192xf32> -> vector<1x192xf32>
    %62 = vector.extract_strided_slice %12 {offsets = [2, 0], sizes = [1, 128], strides = [1, 1]} : vector<8x128xf32> to vector<1x128xf32>
    %63 = vector.extract_strided_slice %61 {offsets = [0, 0], sizes = [1, 128], strides = [1, 1]} : vector<1x192xf32> to vector<1x128xf32>
    %64 = arith.addf %62, %63 : vector<1x128xf32>
    %65 = arith.negf %64 : vector<1x128xf32>
    %66 = math.exp %65 : vector<1x128xf32>
    %cst_23 = arith.constant 1.000000e+00 : f32
    %67 = vector.broadcast %cst_23 : f32 to vector<1x128xf32>
    %68 = arith.addf %67, %66 : vector<1x128xf32>
    %69 = arith.divf %67, %68 : vector<1x128xf32>
    %70 = vector.extract_strided_slice %69 {offsets = [0, 0], sizes = [1, 64], strides = [1, 1]} : vector<1x128xf32> to vector<1x64xf32>
    %71 = vector.extract_strided_slice %69 {offsets = [0, 64], sizes = [1, 64], strides = [1, 1]} : vector<1x128xf32> to vector<1x64xf32>
    %72 = vector.extract_strided_slice %13 {offsets = [2, 0], sizes = [1, 64], strides = [1, 1]} : vector<8x64xf32> to vector<1x64xf32>
    %73 = vector.extract_strided_slice %61 {offsets = [0, 128], sizes = [1, 64], strides = [1, 1]} : vector<1x192xf32> to vector<1x64xf32>
    %74 = arith.addf %73, %15 : vector<1x64xf32>
    %75 = arith.mulf %70, %74 : vector<1x64xf32>
    %76 = arith.addf %72, %75 : vector<1x64xf32>
    %77 = math.tanh %76 : vector<1x64xf32>
    %cst_24 = arith.constant 1.000000e+00 : f32
    %78 = vector.broadcast %cst_24 : f32 to vector<1x64xf32>
    %79 = arith.subf %78, %71 : vector<1x64xf32>
    %80 = arith.mulf %79, %77 : vector<1x64xf32>
    %81 = arith.mulf %71, %60 : vector<1x64xf32>
    %82 = arith.addf %80, %81 : vector<1x64xf32>
    %cst_25 = arith.constant dense<0.000000e+00> : vector<1x192xf32>
    %83 = tpu.matmul %82, %14, %cst_25 {dimension_numbers = #tpu.dot_dimension_numbers<[1], [0], [0], [1], [0, 0, 1, 1], [], []>} : vector<1x64xf32>, vector<64x192xf32>, vector<1x192xf32> -> vector<1x192xf32>
    %84 = vector.extract_strided_slice %12 {offsets = [3, 0], sizes = [1, 128], strides = [1, 1]} : vector<8x128xf32> to vector<1x128xf32>
    %85 = vector.extract_strided_slice %83 {offsets = [0, 0], sizes = [1, 128], strides = [1, 1]} : vector<1x192xf32> to vector<1x128xf32>
    %86 = arith.addf %84, %85 : vector<1x128xf32>
    %87 = arith.negf %86 : vector<1x128xf32>
    %88 = math.exp %87 : vector<1x128xf32>
    %cst_26 = arith.constant 1.000000e+00 : f32
    %89 = vector.broadcast %cst_26 : f32 to vector<1x128xf32>
    %90 = arith.addf %89, %88 : vector<1x128xf32>
    %91 = arith.divf %89, %90 : vector<1x128xf32>
    %92 = vector.extract_strided_slice %91 {offsets = [0, 0], sizes = [1, 64], strides = [1, 1]} : vector<1x128xf32> to vector<1x64xf32>
    %93 = vector.extract_strided_slice %91 {offsets = [0, 64], sizes = [1, 64], strides = [1, 1]} : vector<1x128xf32> to vector<1x64xf32>
    %94 = vector.extract_strided_slice %13 {offsets = [3, 0], sizes = [1, 64], strides = [1, 1]} : vector<8x64xf32> to vector<1x64xf32>
    %95 = vector.extract_strided_slice %83 {offsets = [0, 128], sizes = [1, 64], strides = [1, 1]} : vector<1x192xf32> to vector<1x64xf32>
    %96 = arith.addf %95, %15 : vector<1x64xf32>
    %97 = arith.mulf %92, %96 : vector<1x64xf32>
    %98 = arith.addf %94, %97 : vector<1x64xf32>
    %99 = math.tanh %98 : vector<1x64xf32>
    %cst_27 = arith.constant 1.000000e+00 : f32
    %100 = vector.broadcast %cst_27 : f32 to vector<1x64xf32>
    %101 = arith.subf %100, %93 : vector<1x64xf32>
    %102 = arith.mulf %101, %99 : vector<1x64xf32>
    %103 = arith.mulf %93, %82 : vector<1x64xf32>
    %104 = arith.addf %102, %103 : vector<1x64xf32>
    %cst_28 = arith.constant dense<0.000000e+00> : vector<1x192xf32>
    %105 = tpu.matmul %104, %14, %cst_28 {dimension_numbers = #tpu.dot_dimension_numbers<[1], [0], [0], [1], [0, 0, 1, 1], [], []>} : vector<1x64xf32>, vector<64x192xf32>, vector<1x192xf32> -> vector<1x192xf32>
    %106 = vector.extract_strided_slice %12 {offsets = [4, 0], sizes = [1, 128], strides = [1, 1]} : vector<8x128xf32> to vector<1x128xf32>
    %107 = vector.extract_strided_slice %105 {offsets = [0, 0], sizes = [1, 128], strides = [1, 1]} : vector<1x192xf32> to vector<1x128xf32>
    %108 = arith.addf %106, %107 : vector<1x128xf32>
    %109 = arith.negf %108 : vector<1x128xf32>
    %110 = math.exp %109 : vector<1x128xf32>
    %cst_29 = arith.constant 1.000000e+00 : f32
    %111 = vector.broadcast %cst_29 : f32 to vector<1x128xf32>
    %112 = arith.addf %111, %110 : vector<1x128xf32>
    %113 = arith.divf %111, %112 : vector<1x128xf32>
    %114 = vector.extract_strided_slice %113 {offsets = [0, 0], sizes = [1, 64], strides = [1, 1]} : vector<1x128xf32> to vector<1x64xf32>
    %115 = vector.extract_strided_slice %113 {offsets = [0, 64], sizes = [1, 64], strides = [1, 1]} : vector<1x128xf32> to vector<1x64xf32>
    %116 = vector.extract_strided_slice %13 {offsets = [4, 0], sizes = [1, 64], strides = [1, 1]} : vector<8x64xf32> to vector<1x64xf32>
    %117 = vector.extract_strided_slice %105 {offsets = [0, 128], sizes = [1, 64], strides = [1, 1]} : vector<1x192xf32> to vector<1x64xf32>
    %118 = arith.addf %117, %15 : vector<1x64xf32>
    %119 = arith.mulf %114, %118 : vector<1x64xf32>
    %120 = arith.addf %116, %119 : vector<1x64xf32>
    %121 = math.tanh %120 : vector<1x64xf32>
    %cst_30 = arith.constant 1.000000e+00 : f32
    %122 = vector.broadcast %cst_30 : f32 to vector<1x64xf32>
    %123 = arith.subf %122, %115 : vector<1x64xf32>
    %124 = arith.mulf %123, %121 : vector<1x64xf32>
    %125 = arith.mulf %115, %104 : vector<1x64xf32>
    %126 = arith.addf %124, %125 : vector<1x64xf32>
    %cst_31 = arith.constant dense<0.000000e+00> : vector<1x192xf32>
    %127 = tpu.matmul %126, %14, %cst_31 {dimension_numbers = #tpu.dot_dimension_numbers<[1], [0], [0], [1], [0, 0, 1, 1], [], []>} : vector<1x64xf32>, vector<64x192xf32>, vector<1x192xf32> -> vector<1x192xf32>
    %128 = vector.extract_strided_slice %12 {offsets = [5, 0], sizes = [1, 128], strides = [1, 1]} : vector<8x128xf32> to vector<1x128xf32>
    %129 = vector.extract_strided_slice %127 {offsets = [0, 0], sizes = [1, 128], strides = [1, 1]} : vector<1x192xf32> to vector<1x128xf32>
    %130 = arith.addf %128, %129 : vector<1x128xf32>
    %131 = arith.negf %130 : vector<1x128xf32>
    %132 = math.exp %131 : vector<1x128xf32>
    %cst_32 = arith.constant 1.000000e+00 : f32
    %133 = vector.broadcast %cst_32 : f32 to vector<1x128xf32>
    %134 = arith.addf %133, %132 : vector<1x128xf32>
    %135 = arith.divf %133, %134 : vector<1x128xf32>
    %136 = vector.extract_strided_slice %135 {offsets = [0, 0], sizes = [1, 64], strides = [1, 1]} : vector<1x128xf32> to vector<1x64xf32>
    %137 = vector.extract_strided_slice %135 {offsets = [0, 64], sizes = [1, 64], strides = [1, 1]} : vector<1x128xf32> to vector<1x64xf32>
    %138 = vector.extract_strided_slice %13 {offsets = [5, 0], sizes = [1, 64], strides = [1, 1]} : vector<8x64xf32> to vector<1x64xf32>
    %139 = vector.extract_strided_slice %127 {offsets = [0, 128], sizes = [1, 64], strides = [1, 1]} : vector<1x192xf32> to vector<1x64xf32>
    %140 = arith.addf %139, %15 : vector<1x64xf32>
    %141 = arith.mulf %136, %140 : vector<1x64xf32>
    %142 = arith.addf %138, %141 : vector<1x64xf32>
    %143 = math.tanh %142 : vector<1x64xf32>
    %cst_33 = arith.constant 1.000000e+00 : f32
    %144 = vector.broadcast %cst_33 : f32 to vector<1x64xf32>
    %145 = arith.subf %144, %137 : vector<1x64xf32>
    %146 = arith.mulf %145, %143 : vector<1x64xf32>
    %147 = arith.mulf %137, %126 : vector<1x64xf32>
    %148 = arith.addf %146, %147 : vector<1x64xf32>
    %cst_34 = arith.constant dense<0.000000e+00> : vector<1x192xf32>
    %149 = tpu.matmul %148, %14, %cst_34 {dimension_numbers = #tpu.dot_dimension_numbers<[1], [0], [0], [1], [0, 0, 1, 1], [], []>} : vector<1x64xf32>, vector<64x192xf32>, vector<1x192xf32> -> vector<1x192xf32>
    %150 = vector.extract_strided_slice %12 {offsets = [6, 0], sizes = [1, 128], strides = [1, 1]} : vector<8x128xf32> to vector<1x128xf32>
    %151 = vector.extract_strided_slice %149 {offsets = [0, 0], sizes = [1, 128], strides = [1, 1]} : vector<1x192xf32> to vector<1x128xf32>
    %152 = arith.addf %150, %151 : vector<1x128xf32>
    %153 = arith.negf %152 : vector<1x128xf32>
    %154 = math.exp %153 : vector<1x128xf32>
    %cst_35 = arith.constant 1.000000e+00 : f32
    %155 = vector.broadcast %cst_35 : f32 to vector<1x128xf32>
    %156 = arith.addf %155, %154 : vector<1x128xf32>
    %157 = arith.divf %155, %156 : vector<1x128xf32>
    %158 = vector.extract_strided_slice %157 {offsets = [0, 0], sizes = [1, 64], strides = [1, 1]} : vector<1x128xf32> to vector<1x64xf32>
    %159 = vector.extract_strided_slice %157 {offsets = [0, 64], sizes = [1, 64], strides = [1, 1]} : vector<1x128xf32> to vector<1x64xf32>
    %160 = vector.extract_strided_slice %13 {offsets = [6, 0], sizes = [1, 64], strides = [1, 1]} : vector<8x64xf32> to vector<1x64xf32>
    %161 = vector.extract_strided_slice %149 {offsets = [0, 128], sizes = [1, 64], strides = [1, 1]} : vector<1x192xf32> to vector<1x64xf32>
    %162 = arith.addf %161, %15 : vector<1x64xf32>
    %163 = arith.mulf %158, %162 : vector<1x64xf32>
    %164 = arith.addf %160, %163 : vector<1x64xf32>
    %165 = math.tanh %164 : vector<1x64xf32>
    %cst_36 = arith.constant 1.000000e+00 : f32
    %166 = vector.broadcast %cst_36 : f32 to vector<1x64xf32>
    %167 = arith.subf %166, %159 : vector<1x64xf32>
    %168 = arith.mulf %167, %165 : vector<1x64xf32>
    %169 = arith.mulf %159, %148 : vector<1x64xf32>
    %170 = arith.addf %168, %169 : vector<1x64xf32>
    %cst_37 = arith.constant dense<0.000000e+00> : vector<1x192xf32>
    %171 = tpu.matmul %170, %14, %cst_37 {dimension_numbers = #tpu.dot_dimension_numbers<[1], [0], [0], [1], [0, 0, 1, 1], [], []>} : vector<1x64xf32>, vector<64x192xf32>, vector<1x192xf32> -> vector<1x192xf32>
    %172 = vector.extract_strided_slice %12 {offsets = [7, 0], sizes = [1, 128], strides = [1, 1]} : vector<8x128xf32> to vector<1x128xf32>
    %173 = vector.extract_strided_slice %171 {offsets = [0, 0], sizes = [1, 128], strides = [1, 1]} : vector<1x192xf32> to vector<1x128xf32>
    %174 = arith.addf %172, %173 : vector<1x128xf32>
    %175 = arith.negf %174 : vector<1x128xf32>
    %176 = math.exp %175 : vector<1x128xf32>
    %cst_38 = arith.constant 1.000000e+00 : f32
    %177 = vector.broadcast %cst_38 : f32 to vector<1x128xf32>
    %178 = arith.addf %177, %176 : vector<1x128xf32>
    %179 = arith.divf %177, %178 : vector<1x128xf32>
    %180 = vector.extract_strided_slice %179 {offsets = [0, 0], sizes = [1, 64], strides = [1, 1]} : vector<1x128xf32> to vector<1x64xf32>
    %181 = vector.extract_strided_slice %179 {offsets = [0, 64], sizes = [1, 64], strides = [1, 1]} : vector<1x128xf32> to vector<1x64xf32>
    %182 = vector.extract_strided_slice %13 {offsets = [7, 0], sizes = [1, 64], strides = [1, 1]} : vector<8x64xf32> to vector<1x64xf32>
    %183 = vector.extract_strided_slice %171 {offsets = [0, 128], sizes = [1, 64], strides = [1, 1]} : vector<1x192xf32> to vector<1x64xf32>
    %184 = arith.addf %183, %15 : vector<1x64xf32>
    %185 = arith.mulf %180, %184 : vector<1x64xf32>
    %186 = arith.addf %182, %185 : vector<1x64xf32>
    %187 = math.tanh %186 : vector<1x64xf32>
    %cst_39 = arith.constant 1.000000e+00 : f32
    %188 = vector.broadcast %cst_39 : f32 to vector<1x64xf32>
    %189 = arith.subf %188, %181 : vector<1x64xf32>
    %190 = arith.mulf %189, %187 : vector<1x64xf32>
    %191 = arith.mulf %181, %170 : vector<1x64xf32>
    %192 = arith.addf %190, %191 : vector<1x64xf32>
    %193 = tpu.concatenate %38, %60, %82, %104, %126, %148, %170, %192 in 0 : vector<1x64xf32>, vector<1x64xf32>, vector<1x64xf32>, vector<1x64xf32>, vector<1x64xf32>, vector<1x64xf32>, vector<1x64xf32>, vector<1x64xf32> -> vector<8x64xf32>
    %194 = tpu.concatenate %192, %170, %148, %126, %104, %82, %60, %38 in 0 : vector<1x64xf32>, vector<1x64xf32>, vector<1x64xf32>, vector<1x64xf32>, vector<1x64xf32>, vector<1x64xf32>, vector<1x64xf32>, vector<1x64xf32> -> vector<8x64xf32>
    %195 = vector.extract_strided_slice %193 {offsets = [0, 0], sizes = [8, 32], strides = [1, 1]} : vector<8x64xf32> to vector<8x32xf32>
    %196 = vector.extract_strided_slice %194 {offsets = [0, 32], sizes = [8, 32], strides = [1, 1]} : vector<8x64xf32> to vector<8x32xf32>
    %197 = tpu.concatenate %195, %196 in 1 : vector<8x32xf32>, vector<8x32xf32> -> vector<8x64xf32>
    %198 = vector.extract_strided_slice %194 {offsets = [0, 0], sizes = [8, 32], strides = [1, 1]} : vector<8x64xf32> to vector<8x32xf32>
    %199 = vector.extract_strided_slice %193 {offsets = [0, 32], sizes = [8, 32], strides = [1, 1]} : vector<8x64xf32> to vector<8x32xf32>
    %200 = tpu.concatenate %198, %199 in 1 : vector<8x32xf32>, vector<8x32xf32> -> vector<8x64xf32>
    %c0_40 = arith.constant 0 : index
    %c0_41 = arith.constant 0 : index
    %c0_42 = arith.constant 0 : index
    %201 = vector.load %arg6[%c0_40, %c0_41, %c0_42] : memref<2x64x192xf32, #tpu.memory_space<vmem>>, vector<1x64x192xf32>
    %202 = vector.shape_cast %201 : vector<1x64x192xf32> to vector<64x192xf32>
    %cst_43 = arith.constant dense<0.000000e+00> : vector<8x192xf32>
    %203 = tpu.matmul %197, %202, %cst_43 {dimension_numbers = #tpu.dot_dimension_numbers<[1], [0], [0], [1], [0, 0, 1, 1], [], []>} : vector<8x64xf32>, vector<64x192xf32>, vector<8x192xf32> -> vector<8x192xf32>
    %c1_44 = arith.constant 1 : index
    %c0_45 = arith.constant 0 : index
    %c0_46 = arith.constant 0 : index
    %204 = vector.load %arg6[%c1_44, %c0_45, %c0_46] : memref<2x64x192xf32, #tpu.memory_space<vmem>>, vector<1x64x192xf32>
    %205 = vector.shape_cast %204 : vector<1x64x192xf32> to vector<64x192xf32>
    %cst_47 = arith.constant dense<0.000000e+00> : vector<8x192xf32>
    %206 = tpu.matmul %200, %205, %cst_47 {dimension_numbers = #tpu.dot_dimension_numbers<[1], [0], [0], [1], [0, 0, 1, 1], [], []>} : vector<8x64xf32>, vector<64x192xf32>, vector<8x192xf32> -> vector<8x192xf32>
    %207 = arith.addf %203, %206 : vector<8x192xf32>
    %c0_48 = arith.constant 0 : index
    %c0_49 = arith.constant 0 : index
    %208 = vector.load %arg8[%c0_48, %c0_49] : memref<1x192xf32, #tpu.memory_space<vmem>>, vector<1x192xf32>
    %209 = vector.broadcast %208 : vector<1x192xf32> to vector<8x192xf32>
    %210 = arith.addf %207, %209 : vector<8x192xf32>
    %211 = vector.extract_strided_slice %210 {offsets = [0, 0], sizes = [8, 128], strides = [1, 1]} : vector<8x192xf32> to vector<8x128xf32>
    %212 = vector.extract_strided_slice %210 {offsets = [0, 128], sizes = [8, 64], strides = [1, 1]} : vector<8x192xf32> to vector<8x64xf32>
    %c0_50 = arith.constant 0 : index
    %c0_51 = arith.constant 0 : index
    %213 = vector.load %arg7[%c0_50, %c0_51] : memref<64x192xf32, #tpu.memory_space<vmem>>, vector<64x192xf32>
    %c0_52 = arith.constant 0 : index
    %c0_53 = arith.constant 0 : index
    %214 = vector.load %arg9[%c0_52, %c0_53] : memref<1x64xf32, #tpu.memory_space<vmem>>, vector<1x64xf32>
    %cst_54 = arith.constant 0.000000e+00 : f32
    %215 = vector.broadcast %cst_54 : f32 to vector<1x64xf32>
    %cst_55 = arith.constant dense<0.000000e+00> : vector<1x192xf32>
    %216 = tpu.matmul %215, %213, %cst_55 {dimension_numbers = #tpu.dot_dimension_numbers<[1], [0], [0], [1], [0, 0, 1, 1], [], []>} : vector<1x64xf32>, vector<64x192xf32>, vector<1x192xf32> -> vector<1x192xf32>
    %217 = vector.extract_strided_slice %211 {offsets = [0, 0], sizes = [1, 128], strides = [1, 1]} : vector<8x128xf32> to vector<1x128xf32>
    %218 = vector.extract_strided_slice %216 {offsets = [0, 0], sizes = [1, 128], strides = [1, 1]} : vector<1x192xf32> to vector<1x128xf32>
    %219 = arith.addf %217, %218 : vector<1x128xf32>
    %220 = arith.negf %219 : vector<1x128xf32>
    %221 = math.exp %220 : vector<1x128xf32>
    %cst_56 = arith.constant 1.000000e+00 : f32
    %222 = vector.broadcast %cst_56 : f32 to vector<1x128xf32>
    %223 = arith.addf %222, %221 : vector<1x128xf32>
    %224 = arith.divf %222, %223 : vector<1x128xf32>
    %225 = vector.extract_strided_slice %224 {offsets = [0, 0], sizes = [1, 64], strides = [1, 1]} : vector<1x128xf32> to vector<1x64xf32>
    %226 = vector.extract_strided_slice %224 {offsets = [0, 64], sizes = [1, 64], strides = [1, 1]} : vector<1x128xf32> to vector<1x64xf32>
    %227 = vector.extract_strided_slice %212 {offsets = [0, 0], sizes = [1, 64], strides = [1, 1]} : vector<8x64xf32> to vector<1x64xf32>
    %228 = vector.extract_strided_slice %216 {offsets = [0, 128], sizes = [1, 64], strides = [1, 1]} : vector<1x192xf32> to vector<1x64xf32>
    %229 = arith.addf %228, %214 : vector<1x64xf32>
    %230 = arith.mulf %225, %229 : vector<1x64xf32>
    %231 = arith.addf %227, %230 : vector<1x64xf32>
    %232 = math.tanh %231 : vector<1x64xf32>
    %cst_57 = arith.constant 1.000000e+00 : f32
    %233 = vector.broadcast %cst_57 : f32 to vector<1x64xf32>
    %234 = arith.subf %233, %226 : vector<1x64xf32>
    %235 = arith.mulf %234, %232 : vector<1x64xf32>
    %236 = arith.mulf %226, %215 : vector<1x64xf32>
    %237 = arith.addf %235, %236 : vector<1x64xf32>
    %cst_58 = arith.constant dense<0.000000e+00> : vector<1x192xf32>
    %238 = tpu.matmul %237, %213, %cst_58 {dimension_numbers = #tpu.dot_dimension_numbers<[1], [0], [0], [1], [0, 0, 1, 1], [], []>} : vector<1x64xf32>, vector<64x192xf32>, vector<1x192xf32> -> vector<1x192xf32>
    %239 = vector.extract_strided_slice %211 {offsets = [1, 0], sizes = [1, 128], strides = [1, 1]} : vector<8x128xf32> to vector<1x128xf32>
    %240 = vector.extract_strided_slice %238 {offsets = [0, 0], sizes = [1, 128], strides = [1, 1]} : vector<1x192xf32> to vector<1x128xf32>
    %241 = arith.addf %239, %240 : vector<1x128xf32>
    %242 = arith.negf %241 : vector<1x128xf32>
    %243 = math.exp %242 : vector<1x128xf32>
    %cst_59 = arith.constant 1.000000e+00 : f32
    %244 = vector.broadcast %cst_59 : f32 to vector<1x128xf32>
    %245 = arith.addf %244, %243 : vector<1x128xf32>
    %246 = arith.divf %244, %245 : vector<1x128xf32>
    %247 = vector.extract_strided_slice %246 {offsets = [0, 0], sizes = [1, 64], strides = [1, 1]} : vector<1x128xf32> to vector<1x64xf32>
    %248 = vector.extract_strided_slice %246 {offsets = [0, 64], sizes = [1, 64], strides = [1, 1]} : vector<1x128xf32> to vector<1x64xf32>
    %249 = vector.extract_strided_slice %212 {offsets = [1, 0], sizes = [1, 64], strides = [1, 1]} : vector<8x64xf32> to vector<1x64xf32>
    %250 = vector.extract_strided_slice %238 {offsets = [0, 128], sizes = [1, 64], strides = [1, 1]} : vector<1x192xf32> to vector<1x64xf32>
    %251 = arith.addf %250, %214 : vector<1x64xf32>
    %252 = arith.mulf %247, %251 : vector<1x64xf32>
    %253 = arith.addf %249, %252 : vector<1x64xf32>
    %254 = math.tanh %253 : vector<1x64xf32>
    %cst_60 = arith.constant 1.000000e+00 : f32
    %255 = vector.broadcast %cst_60 : f32 to vector<1x64xf32>
    %256 = arith.subf %255, %248 : vector<1x64xf32>
    %257 = arith.mulf %256, %254 : vector<1x64xf32>
    %258 = arith.mulf %248, %237 : vector<1x64xf32>
    %259 = arith.addf %257, %258 : vector<1x64xf32>
    %cst_61 = arith.constant dense<0.000000e+00> : vector<1x192xf32>
    %260 = tpu.matmul %259, %213, %cst_61 {dimension_numbers = #tpu.dot_dimension_numbers<[1], [0], [0], [1], [0, 0, 1, 1], [], []>} : vector<1x64xf32>, vector<64x192xf32>, vector<1x192xf32> -> vector<1x192xf32>
    %261 = vector.extract_strided_slice %211 {offsets = [2, 0], sizes = [1, 128], strides = [1, 1]} : vector<8x128xf32> to vector<1x128xf32>
    %262 = vector.extract_strided_slice %260 {offsets = [0, 0], sizes = [1, 128], strides = [1, 1]} : vector<1x192xf32> to vector<1x128xf32>
    %263 = arith.addf %261, %262 : vector<1x128xf32>
    %264 = arith.negf %263 : vector<1x128xf32>
    %265 = math.exp %264 : vector<1x128xf32>
    %cst_62 = arith.constant 1.000000e+00 : f32
    %266 = vector.broadcast %cst_62 : f32 to vector<1x128xf32>
    %267 = arith.addf %266, %265 : vector<1x128xf32>
    %268 = arith.divf %266, %267 : vector<1x128xf32>
    %269 = vector.extract_strided_slice %268 {offsets = [0, 0], sizes = [1, 64], strides = [1, 1]} : vector<1x128xf32> to vector<1x64xf32>
    %270 = vector.extract_strided_slice %268 {offsets = [0, 64], sizes = [1, 64], strides = [1, 1]} : vector<1x128xf32> to vector<1x64xf32>
    %271 = vector.extract_strided_slice %212 {offsets = [2, 0], sizes = [1, 64], strides = [1, 1]} : vector<8x64xf32> to vector<1x64xf32>
    %272 = vector.extract_strided_slice %260 {offsets = [0, 128], sizes = [1, 64], strides = [1, 1]} : vector<1x192xf32> to vector<1x64xf32>
    %273 = arith.addf %272, %214 : vector<1x64xf32>
    %274 = arith.mulf %269, %273 : vector<1x64xf32>
    %275 = arith.addf %271, %274 : vector<1x64xf32>
    %276 = math.tanh %275 : vector<1x64xf32>
    %cst_63 = arith.constant 1.000000e+00 : f32
    %277 = vector.broadcast %cst_63 : f32 to vector<1x64xf32>
    %278 = arith.subf %277, %270 : vector<1x64xf32>
    %279 = arith.mulf %278, %276 : vector<1x64xf32>
    %280 = arith.mulf %270, %259 : vector<1x64xf32>
    %281 = arith.addf %279, %280 : vector<1x64xf32>
    %cst_64 = arith.constant dense<0.000000e+00> : vector<1x192xf32>
    %282 = tpu.matmul %281, %213, %cst_64 {dimension_numbers = #tpu.dot_dimension_numbers<[1], [0], [0], [1], [0, 0, 1, 1], [], []>} : vector<1x64xf32>, vector<64x192xf32>, vector<1x192xf32> -> vector<1x192xf32>
    %283 = vector.extract_strided_slice %211 {offsets = [3, 0], sizes = [1, 128], strides = [1, 1]} : vector<8x128xf32> to vector<1x128xf32>
    %284 = vector.extract_strided_slice %282 {offsets = [0, 0], sizes = [1, 128], strides = [1, 1]} : vector<1x192xf32> to vector<1x128xf32>
    %285 = arith.addf %283, %284 : vector<1x128xf32>
    %286 = arith.negf %285 : vector<1x128xf32>
    %287 = math.exp %286 : vector<1x128xf32>
    %cst_65 = arith.constant 1.000000e+00 : f32
    %288 = vector.broadcast %cst_65 : f32 to vector<1x128xf32>
    %289 = arith.addf %288, %287 : vector<1x128xf32>
    %290 = arith.divf %288, %289 : vector<1x128xf32>
    %291 = vector.extract_strided_slice %290 {offsets = [0, 0], sizes = [1, 64], strides = [1, 1]} : vector<1x128xf32> to vector<1x64xf32>
    %292 = vector.extract_strided_slice %290 {offsets = [0, 64], sizes = [1, 64], strides = [1, 1]} : vector<1x128xf32> to vector<1x64xf32>
    %293 = vector.extract_strided_slice %212 {offsets = [3, 0], sizes = [1, 64], strides = [1, 1]} : vector<8x64xf32> to vector<1x64xf32>
    %294 = vector.extract_strided_slice %282 {offsets = [0, 128], sizes = [1, 64], strides = [1, 1]} : vector<1x192xf32> to vector<1x64xf32>
    %295 = arith.addf %294, %214 : vector<1x64xf32>
    %296 = arith.mulf %291, %295 : vector<1x64xf32>
    %297 = arith.addf %293, %296 : vector<1x64xf32>
    %298 = math.tanh %297 : vector<1x64xf32>
    %cst_66 = arith.constant 1.000000e+00 : f32
    %299 = vector.broadcast %cst_66 : f32 to vector<1x64xf32>
    %300 = arith.subf %299, %292 : vector<1x64xf32>
    %301 = arith.mulf %300, %298 : vector<1x64xf32>
    %302 = arith.mulf %292, %281 : vector<1x64xf32>
    %303 = arith.addf %301, %302 : vector<1x64xf32>
    %cst_67 = arith.constant dense<0.000000e+00> : vector<1x192xf32>
    %304 = tpu.matmul %303, %213, %cst_67 {dimension_numbers = #tpu.dot_dimension_numbers<[1], [0], [0], [1], [0, 0, 1, 1], [], []>} : vector<1x64xf32>, vector<64x192xf32>, vector<1x192xf32> -> vector<1x192xf32>
    %305 = vector.extract_strided_slice %211 {offsets = [4, 0], sizes = [1, 128], strides = [1, 1]} : vector<8x128xf32> to vector<1x128xf32>
    %306 = vector.extract_strided_slice %304 {offsets = [0, 0], sizes = [1, 128], strides = [1, 1]} : vector<1x192xf32> to vector<1x128xf32>
    %307 = arith.addf %305, %306 : vector<1x128xf32>
    %308 = arith.negf %307 : vector<1x128xf32>
    %309 = math.exp %308 : vector<1x128xf32>
    %cst_68 = arith.constant 1.000000e+00 : f32
    %310 = vector.broadcast %cst_68 : f32 to vector<1x128xf32>
    %311 = arith.addf %310, %309 : vector<1x128xf32>
    %312 = arith.divf %310, %311 : vector<1x128xf32>
    %313 = vector.extract_strided_slice %312 {offsets = [0, 0], sizes = [1, 64], strides = [1, 1]} : vector<1x128xf32> to vector<1x64xf32>
    %314 = vector.extract_strided_slice %312 {offsets = [0, 64], sizes = [1, 64], strides = [1, 1]} : vector<1x128xf32> to vector<1x64xf32>
    %315 = vector.extract_strided_slice %212 {offsets = [4, 0], sizes = [1, 64], strides = [1, 1]} : vector<8x64xf32> to vector<1x64xf32>
    %316 = vector.extract_strided_slice %304 {offsets = [0, 128], sizes = [1, 64], strides = [1, 1]} : vector<1x192xf32> to vector<1x64xf32>
    %317 = arith.addf %316, %214 : vector<1x64xf32>
    %318 = arith.mulf %313, %317 : vector<1x64xf32>
    %319 = arith.addf %315, %318 : vector<1x64xf32>
    %320 = math.tanh %319 : vector<1x64xf32>
    %cst_69 = arith.constant 1.000000e+00 : f32
    %321 = vector.broadcast %cst_69 : f32 to vector<1x64xf32>
    %322 = arith.subf %321, %314 : vector<1x64xf32>
    %323 = arith.mulf %322, %320 : vector<1x64xf32>
    %324 = arith.mulf %314, %303 : vector<1x64xf32>
    %325 = arith.addf %323, %324 : vector<1x64xf32>
    %cst_70 = arith.constant dense<0.000000e+00> : vector<1x192xf32>
    %326 = tpu.matmul %325, %213, %cst_70 {dimension_numbers = #tpu.dot_dimension_numbers<[1], [0], [0], [1], [0, 0, 1, 1], [], []>} : vector<1x64xf32>, vector<64x192xf32>, vector<1x192xf32> -> vector<1x192xf32>
    %327 = vector.extract_strided_slice %211 {offsets = [5, 0], sizes = [1, 128], strides = [1, 1]} : vector<8x128xf32> to vector<1x128xf32>
    %328 = vector.extract_strided_slice %326 {offsets = [0, 0], sizes = [1, 128], strides = [1, 1]} : vector<1x192xf32> to vector<1x128xf32>
    %329 = arith.addf %327, %328 : vector<1x128xf32>
    %330 = arith.negf %329 : vector<1x128xf32>
    %331 = math.exp %330 : vector<1x128xf32>
    %cst_71 = arith.constant 1.000000e+00 : f32
    %332 = vector.broadcast %cst_71 : f32 to vector<1x128xf32>
    %333 = arith.addf %332, %331 : vector<1x128xf32>
    %334 = arith.divf %332, %333 : vector<1x128xf32>
    %335 = vector.extract_strided_slice %334 {offsets = [0, 0], sizes = [1, 64], strides = [1, 1]} : vector<1x128xf32> to vector<1x64xf32>
    %336 = vector.extract_strided_slice %334 {offsets = [0, 64], sizes = [1, 64], strides = [1, 1]} : vector<1x128xf32> to vector<1x64xf32>
    %337 = vector.extract_strided_slice %212 {offsets = [5, 0], sizes = [1, 64], strides = [1, 1]} : vector<8x64xf32> to vector<1x64xf32>
    %338 = vector.extract_strided_slice %326 {offsets = [0, 128], sizes = [1, 64], strides = [1, 1]} : vector<1x192xf32> to vector<1x64xf32>
    %339 = arith.addf %338, %214 : vector<1x64xf32>
    %340 = arith.mulf %335, %339 : vector<1x64xf32>
    %341 = arith.addf %337, %340 : vector<1x64xf32>
    %342 = math.tanh %341 : vector<1x64xf32>
    %cst_72 = arith.constant 1.000000e+00 : f32
    %343 = vector.broadcast %cst_72 : f32 to vector<1x64xf32>
    %344 = arith.subf %343, %336 : vector<1x64xf32>
    %345 = arith.mulf %344, %342 : vector<1x64xf32>
    %346 = arith.mulf %336, %325 : vector<1x64xf32>
    %347 = arith.addf %345, %346 : vector<1x64xf32>
    %cst_73 = arith.constant dense<0.000000e+00> : vector<1x192xf32>
    %348 = tpu.matmul %347, %213, %cst_73 {dimension_numbers = #tpu.dot_dimension_numbers<[1], [0], [0], [1], [0, 0, 1, 1], [], []>} : vector<1x64xf32>, vector<64x192xf32>, vector<1x192xf32> -> vector<1x192xf32>
    %349 = vector.extract_strided_slice %211 {offsets = [6, 0], sizes = [1, 128], strides = [1, 1]} : vector<8x128xf32> to vector<1x128xf32>
    %350 = vector.extract_strided_slice %348 {offsets = [0, 0], sizes = [1, 128], strides = [1, 1]} : vector<1x192xf32> to vector<1x128xf32>
    %351 = arith.addf %349, %350 : vector<1x128xf32>
    %352 = arith.negf %351 : vector<1x128xf32>
    %353 = math.exp %352 : vector<1x128xf32>
    %cst_74 = arith.constant 1.000000e+00 : f32
    %354 = vector.broadcast %cst_74 : f32 to vector<1x128xf32>
    %355 = arith.addf %354, %353 : vector<1x128xf32>
    %356 = arith.divf %354, %355 : vector<1x128xf32>
    %357 = vector.extract_strided_slice %356 {offsets = [0, 0], sizes = [1, 64], strides = [1, 1]} : vector<1x128xf32> to vector<1x64xf32>
    %358 = vector.extract_strided_slice %356 {offsets = [0, 64], sizes = [1, 64], strides = [1, 1]} : vector<1x128xf32> to vector<1x64xf32>
    %359 = vector.extract_strided_slice %212 {offsets = [6, 0], sizes = [1, 64], strides = [1, 1]} : vector<8x64xf32> to vector<1x64xf32>
    %360 = vector.extract_strided_slice %348 {offsets = [0, 128], sizes = [1, 64], strides = [1, 1]} : vector<1x192xf32> to vector<1x64xf32>
    %361 = arith.addf %360, %214 : vector<1x64xf32>
    %362 = arith.mulf %357, %361 : vector<1x64xf32>
    %363 = arith.addf %359, %362 : vector<1x64xf32>
    %364 = math.tanh %363 : vector<1x64xf32>
    %cst_75 = arith.constant 1.000000e+00 : f32
    %365 = vector.broadcast %cst_75 : f32 to vector<1x64xf32>
    %366 = arith.subf %365, %358 : vector<1x64xf32>
    %367 = arith.mulf %366, %364 : vector<1x64xf32>
    %368 = arith.mulf %358, %347 : vector<1x64xf32>
    %369 = arith.addf %367, %368 : vector<1x64xf32>
    %cst_76 = arith.constant dense<0.000000e+00> : vector<1x192xf32>
    %370 = tpu.matmul %369, %213, %cst_76 {dimension_numbers = #tpu.dot_dimension_numbers<[1], [0], [0], [1], [0, 0, 1, 1], [], []>} : vector<1x64xf32>, vector<64x192xf32>, vector<1x192xf32> -> vector<1x192xf32>
    %371 = vector.extract_strided_slice %211 {offsets = [7, 0], sizes = [1, 128], strides = [1, 1]} : vector<8x128xf32> to vector<1x128xf32>
    %372 = vector.extract_strided_slice %370 {offsets = [0, 0], sizes = [1, 128], strides = [1, 1]} : vector<1x192xf32> to vector<1x128xf32>
    %373 = arith.addf %371, %372 : vector<1x128xf32>
    %374 = arith.negf %373 : vector<1x128xf32>
    %375 = math.exp %374 : vector<1x128xf32>
    %cst_77 = arith.constant 1.000000e+00 : f32
    %376 = vector.broadcast %cst_77 : f32 to vector<1x128xf32>
    %377 = arith.addf %376, %375 : vector<1x128xf32>
    %378 = arith.divf %376, %377 : vector<1x128xf32>
    %379 = vector.extract_strided_slice %378 {offsets = [0, 0], sizes = [1, 64], strides = [1, 1]} : vector<1x128xf32> to vector<1x64xf32>
    %380 = vector.extract_strided_slice %378 {offsets = [0, 64], sizes = [1, 64], strides = [1, 1]} : vector<1x128xf32> to vector<1x64xf32>
    %381 = vector.extract_strided_slice %212 {offsets = [7, 0], sizes = [1, 64], strides = [1, 1]} : vector<8x64xf32> to vector<1x64xf32>
    %382 = vector.extract_strided_slice %370 {offsets = [0, 128], sizes = [1, 64], strides = [1, 1]} : vector<1x192xf32> to vector<1x64xf32>
    %383 = arith.addf %382, %214 : vector<1x64xf32>
    %384 = arith.mulf %379, %383 : vector<1x64xf32>
    %385 = arith.addf %381, %384 : vector<1x64xf32>
    %386 = math.tanh %385 : vector<1x64xf32>
    %cst_78 = arith.constant 1.000000e+00 : f32
    %387 = vector.broadcast %cst_78 : f32 to vector<1x64xf32>
    %388 = arith.subf %387, %380 : vector<1x64xf32>
    %389 = arith.mulf %388, %386 : vector<1x64xf32>
    %390 = arith.mulf %380, %369 : vector<1x64xf32>
    %391 = arith.addf %389, %390 : vector<1x64xf32>
    %392 = tpu.concatenate %237, %259, %281, %303, %325, %347, %369, %391 in 0 : vector<1x64xf32>, vector<1x64xf32>, vector<1x64xf32>, vector<1x64xf32>, vector<1x64xf32>, vector<1x64xf32>, vector<1x64xf32>, vector<1x64xf32> -> vector<8x64xf32>
    %393 = tpu.concatenate %391, %369, %347, %325, %303, %281, %259, %237 in 0 : vector<1x64xf32>, vector<1x64xf32>, vector<1x64xf32>, vector<1x64xf32>, vector<1x64xf32>, vector<1x64xf32>, vector<1x64xf32>, vector<1x64xf32> -> vector<8x64xf32>
    %394 = vector.extract_strided_slice %392 {offsets = [0, 0], sizes = [8, 32], strides = [1, 1]} : vector<8x64xf32> to vector<8x32xf32>
    %395 = vector.extract_strided_slice %393 {offsets = [0, 32], sizes = [8, 32], strides = [1, 1]} : vector<8x64xf32> to vector<8x32xf32>
    %396 = arith.addf %394, %395 : vector<8x32xf32>
    %c0_79 = arith.constant 0 : index
    %c0_80 = arith.constant 0 : index
    %397 = vector.load %arg10[%c0_79, %c0_80] : memref<1x32xf32, #tpu.memory_space<vmem>>, vector<1x32xf32>
    %398 = tpu.transpose %396, [1, 0] : vector<8x32xf32> -> vector<32x8xf32>
    %cst_81 = arith.constant dense<0.000000e+00> : vector<1x8xf32>
    %399 = tpu.matmul %397, %398, %cst_81 {dimension_numbers = #tpu.dot_dimension_numbers<[1], [0], [0], [1], [0, 0, 1, 1], [], []>} : vector<1x32xf32>, vector<32x8xf32>, vector<1x8xf32> -> vector<1x8xf32>
    %c0_82 = arith.constant 0 : index
    %c0_83 = arith.constant 0 : index
    %400 = vector.load %arg11[%c0_82, %c0_83] : memref<1x1xf32, #tpu.memory_space<vmem>>, vector<1x1xf32>
    %401 = vector.broadcast %400 : vector<1x1xf32> to vector<1x8xf32>
    %402 = arith.addf %399, %401 : vector<1x8xf32>
    %403 = arith.negf %402 : vector<1x8xf32>
    %404 = math.exp %403 : vector<1x8xf32>
    %cst_84 = arith.constant 1.000000e+00 : f32
    %405 = vector.broadcast %cst_84 : f32 to vector<1x8xf32>
    %406 = arith.addf %405, %404 : vector<1x8xf32>
    %407 = arith.divf %405, %406 : vector<1x8xf32>
    %c0_85 = arith.constant 0 : index
    %c0_86 = arith.constant 0 : index
    %408 = vector.load %arg12[%c0_85, %c0_86] : memref<1x8xf32, #tpu.memory_space<vmem>>, vector<1x8xf32>
    tpu.vector_store %arg12[%c0_85, %c0_86], %407 {strides = array<i32>} : memref<1x8xf32, #tpu.memory_space<vmem>>, vector<1x8xf32>,
    return
  }
}

</mosaic_0001>

<llo_original>
// kernel: network_forward.1
$region0: #{network_forward.1}
  #allocation0 [shape = 'u32[]', space=smem, size = 0x4, offset = 0x4, fixed_abs, tag = 'smem constant byte address 0x4 - core index']
  #allocation1 [shape = 'u32[144,128]{1,0:T(1,128)}', space=vmem, size = 0x12000, scoped, tag = 'internal scratch']
  #allocation2 [shape = 'f32[1,1]{1,0:T(1,128)S(1)}', space=vmem, size = 0x200, scoped, tag = 'scoped memory for network_forward.1']
  %s0 = inlined_call_operand.vmem [shape: f32[8,16], index: 0, kind: input, shape index: {}]
  %s1 = inlined_call_operand.vmem [shape: f32[8,16], index: 1, kind: input, shape index: {}]
  %s2 = inlined_call_operand.hbm [shape: f32[2,16,192], index: 2, kind: input, shape index: {}]
  %s3 = inlined_call_operand.hbm [shape: f32[64,192], index: 3, kind: input, shape index: {}]
  %s4 = inlined_call_operand.vmem [shape: f32[1,192], index: 4, kind: input, shape index: {}]
  %s5 = inlined_call_operand.vmem [shape: f32[1,64], index: 5, kind: input, shape index: {}]
  %s6 = inlined_call_operand.hbm [shape: f32[2,64,192], index: 6, kind: input, shape index: {}]
  %s7 = inlined_call_operand.hbm [shape: f32[64,192], index: 7, kind: input, shape index: {}]
  %s8 = inlined_call_operand.vmem [shape: f32[1,192], index: 8, kind: input, shape index: {}]
  %s9 = inlined_call_operand.vmem [shape: f32[1,64], index: 9, kind: input, shape index: {}]
  %s10 = inlined_call_operand.vmem [shape: f32[1,32], index: 10, kind: input, shape index: {}]
  %s11 = inlined_call_operand.<no memory space> [shape: f32[1,1], index: 11, kind: input, shape index: {}]
  %s12 = inlined_call_operand.hbm [shape: f32[1,8], index: 12, kind: output, shape index: {}]
  %s13 = sld [smem:[#allocation0]]
  $region74: #{network_forward.1} parent=0
    _
  %s15 = ssub.s32 1, %s13
  %s16 = scalar_select 0, %s15, %s13
  %v17 = vstv %s11
  %18 = vst [vmem:[#allocation2] sm:$0x1] %v17
  $region1: #{network_forward.1} parent=0
    #allocation3 [shape = 'u8[32768]{0}', space=vmem, size = 0x8000, scoped, tag = 'input window, operand 2, single buffered']
    #allocation4 [shape = 's32[1]{0}', space=sflag, size = 0x4, scoped, tag = 'scoped memory for network_forward.1']
    #allocation5 [shape = 's32[1]{0}', space=sflag, size = 0x4, scoped, tag = 'scoped memory for network_forward.1']
    #allocation6 [shape = 'u8[65536]{0}', space=vmem, size = 0x10000, scoped, tag = 'input window, operand 3, single buffered']
    #allocation7 [shape = 's32[1]{0}', space=sflag, size = 0x4, scoped, tag = 'scoped memory for network_forward.1']
    #allocation8 [shape = 'u8[131072]{0}', space=vmem, size = 0x20000, scoped, tag = 'input window, operand 6, single buffered']
    #allocation9 [shape = 'u8[65536]{0}', space=vmem, size = 0x10000, scoped, tag = 'input window, operand 7, single buffered']
    #allocation10 [shape = 's32[1]{0}', space=sflag, size = 0x4, scoped, tag = 'scoped memory for network_forward.1']
    #allocation11 [shape = 'u8[512]{0}', space=vmem, size = 0x400, scoped, tag = 'output window, operand 0, single buffered']
    %19 = vsyncpa [#allocation4], 0
    %20 = vsyncpa [#allocation7], 0
    %21 = vsyncpa [#allocation10], 0
    %22 = vsyncpa [#allocation5], 0
    // Predicated region
    $region2: #{network_forward.1} parent=1 // pred_check
      _
    $region3: #{network_forward.1} parent=1 // pred_check_branch
      %24 = sbr.rel (0) target = $region5
    $region4: #{network_forward.1} parent=1 // pred_region
      _
    $region5: #{network_forward.1} parent=1 // pred_fallthru
      _
    // Predicated region
    $region6: #{network_forward.1} parent=1 // pred_check
      _
    $region7: #{network_forward.1} parent=1 // pred_check_branch
      %26 = sbr.rel (0) target = $region9
    $region8: #{network_forward.1} parent=1 // pred_region
      _
    $region9: #{network_forward.1} parent=1 // pred_fallthru
      _
    // Predicated region
    $region10: #{network_forward.1} parent=1 // pred_check
      _
    $region11: #{network_forward.1} parent=1 // pred_check_branch
      %28 = sbr.rel (0) target = $region13
    $region12: #{network_forward.1} parent=1 // pred_region
      %s30 = ssub.s32 1024, 1024
      %31 = vsyncadd [#allocation4], %s30
      %s32 = sshll.u32 [#allocation3], 4
      %s33 = int_to_ptr.vmem [resolvable:$true] %s32
      %38 = dma.hbm_to_vmem [thread:$0]  %s2, 1024, %s33, [#allocation4], 256, 256, 16
    $region13: #{network_forward.1} parent=1 // pred_fallthru
      _
    // Predicated region
    $region14: #{network_forward.1} parent=1 // pred_check
      _
    $region15: #{network_forward.1} parent=1 // pred_check_branch
      %40 = sbr.rel (0) target = $region17
    $region16: #{network_forward.1} parent=1 // pred_region
      %s42 = ssub.s32 2048, 2048
      %43 = vsyncadd [#allocation7], %s42
      %s44 = sshll.u32 [#allocation6], 4
      %s45 = int_to_ptr.vmem [resolvable:$true] %s44
      %50 = dma.hbm_to_vmem [thread:$0]  %s3, 2048, %s45, [#allocation7], 256, 256, 16
    $region17: #{network_forward.1} parent=1 // pred_fallthru
      _
    // Predicated region
    $region18: #{network_forward.1} parent=1 // pred_check
      _
    $region19: #{network_forward.1} parent=1 // pred_check_branch
      %52 = sbr.rel (0) target = $region21
    $region20: #{network_forward.1} parent=1 // pred_region
      _
    $region21: #{network_forward.1} parent=1 // pred_fallthru
      _
    // Predicated region
    $region22: #{network_forward.1} parent=1 // pred_check
      _
    $region23: #{network_forward.1} parent=1 // pred_check_branch
      %54 = sbr.rel (0) target = $region25
    $region24: #{network_forward.1} parent=1 // pred_region
      _
    $region25: #{network_forward.1} parent=1 // pred_fallthru
      _
    // Predicated region
    $region26: #{network_forward.1} parent=1 // pred_check
      _
    $region27: #{network_forward.1} parent=1 // pred_check_branch
      %56 = sbr.rel (0) target = $region29
    $region28: #{network_forward.1} parent=1 // pred_region
      %s58 = ssub.s32 4096, 4096
      %59 = vsyncadd [#allocation7], %s58
      %s60 = sshll.u32 [#allocation8], 4
      %s61 = int_to_ptr.vmem [resolvable:$true] %s60
      %66 = dma.hbm_to_vmem [thread:$0]  %s6, 4096, %s61, [#allocation7], 256, 256, 16
    $region29: #{network_forward.1} parent=1 // pred_fallthru
      _
    // Predicated region
    $region30: #{network_forward.1} parent=1 // pred_check
      _
    $region31: #{network_forward.1} parent=1 // pred_check_branch
      %68 = sbr.rel (0) target = $region33
    $region32: #{network_forward.1} parent=1 // pred_region
      %s70 = ssub.s32 2048, 2048
      %71 = vsyncadd [#allocation10], %s70
      %s72 = sshll.u32 [#allocation9], 4
      %s73 = int_to_ptr.vmem [resolvable:$true] %s72
      %78 = dma.hbm_to_vmem [thread:$0]  %s7, 2048, %s73, [#allocation10], 256, 256, 16
    $region33: #{network_forward.1} parent=1 // pred_fallthru
      _
    // Predicated region
    $region34: #{network_forward.1} parent=1 // pred_check
      _
    $region35: #{network_forward.1} parent=1 // pred_check_branch
      %80 = sbr.rel (0) target = $region37
    $region36: #{network_forward.1} parent=1 // pred_region
      _
    $region37: #{network_forward.1} parent=1 // pred_fallthru
      _
    // Predicated region
    $region38: #{network_forward.1} parent=1 // pred_check
      _
    $region39: #{network_forward.1} parent=1 // pred_check_branch
      %82 = sbr.rel (0) target = $region41
    $region40: #{network_forward.1} parent=1 // pred_region
      _
    $region41: #{network_forward.1} parent=1 // pred_fallthru
      _
    // Predicated region
    $region42: #{network_forward.1} parent=1 // pred_check
      _
    $region43: #{network_forward.1} parent=1 // pred_check_branch
      %84 = sbr.rel (0) target = $region45
    $region44: #{network_forward.1} parent=1 // pred_region
      _
    $region45: #{network_forward.1} parent=1 // pred_fallthru
      _
    // Predicated region
    $region46: #{network_forward.1} parent=1 // pred_check
      _
    $region47: #{network_forward.1} parent=1 // pred_check_branch
      %86 = sbr.rel (0) target = $region49
    $region48: #{network_forward.1} parent=1 // pred_region
      _
    $region49: #{network_forward.1} parent=1 // pred_fallthru
      _
    // Predicated region
    $region50: #{network_forward.1} parent=1 // pred_check
      _
    $region51: #{network_forward.1} parent=1 // pred_check_branch
      %88 = sbr.rel (0) target = $region53
    $region52: #{network_forward.1} parent=1 // pred_region
      %89 = dma.done [#allocation4], 1024
    $region53: #{network_forward.1} parent=1 // pred_fallthru
      _
    // Predicated region
    $region54: #{network_forward.1} parent=1 // pred_check
      _
    $region55: #{network_forward.1} parent=1 // pred_check_branch
      %91 = sbr.rel (0) target = $region57
    $region56: #{network_forward.1} parent=1 // pred_region
      %92 = dma.done [#allocation7], 2048
    $region57: #{network_forward.1} parent=1 // pred_fallthru
      _
    // Predicated region
    $region58: #{network_forward.1} parent=1 // pred_check
      _
    $region59: #{network_forward.1} parent=1 // pred_check_branch
      %94 = sbr.rel (0) target = $region61
    $region60: #{network_forward.1} parent=1 // pred_region
      %95 = dma.done [#allocation7], 4096
    $region61: #{network_forward.1} parent=1 // pred_fallthru
      _
    // Predicated region
    $region62: #{network_forward.1} parent=1 // pred_check
      _
    $region63: #{network_forward.1} parent=1 // pred_check_branch
      %97 = sbr.rel (0) target = $region65
    $region64: #{network_forward.1} parent=1 // pred_region
      %98 = dma.done [#allocation10], 2048
    $region65: #{network_forward.1} parent=1 // pred_fallthru
      _
    %v99 = vld [vmem:[%s0] sm:$0xff]
    %v100 = vld [vmem:[%s1] sm:$0xff]
    %v101 = vld [vmem:[#allocation3] sm:$0xff]
    %v102 = vld [vmem:[#allocation3 + $0x8] sm:$0xff]
    %v103 = vld [vmem:[#allocation3 + $0x10] sm:$0xff]
    %v104 = vld [vmem:[#allocation3 + $0x18] sm:$0xff]
    %s105 = scalar_lea.vmem [#allocation3], 32
    %v106 = vld [vmem:[%s105] sm:$0xff]
    %v107 = vld [vmem:[%s105 + $0x8] sm:$0xff]
    %v108 = vld [vmem:[%s105 + $0x10] sm:$0xff]
    %v109 = vld [vmem:[%s105 + $0x18] sm:$0xff]
    %vm110 = vcmask 130048
    %v112 = vsel %vm110, %v100, 0
    %114 = vmatprep.subr.mxu0 %v107
    %115 = vmatpush1.msra.mxu0 %v106
    %116 = vmatprep.subr.mxu0 %v109
    %117 = vmatpush1.msra.mxu0 %v108
    %118 = vmatprep.subr.mxu0 0.0
    %119 = vmatpush1.msra.mxu0 0.0
    %120 = vmatprep.subr.mxu0 0.0
    %121 = vmatpush1.msra.mxu0 0.0
    %122 = vmatprep.subr.mxu0 0.0
    %123 = vmatpush1.msra.mxu0 0.0
    %124 = vmatprep.subr.mxu0 0.0
    %125 = vmatpush1.msra.mxu0 0.0
    %126 = vmatprep.subr.mxu0 0.0
    %127 = vmatpush1.msra.mxu0 0.0
    %128 = vmatprep.subr.mxu0 0.0
    %129 = vmatpush1.msra.mxu0 0.0
    %130 = vmatprep.subr.mxu0 0.0
    %131 = vmatpush1.msra.mxu0 0.0
    %132 = vmatprep.subr.mxu0 0.0
    %133 = vmatpush1.msra.mxu0 0.0
    %134 = vmatprep.subr.mxu0 0.0
    %135 = vmatpush1.msra.mxu0 0.0
    %136 = vmatprep.subr.mxu0 0.0
    %137 = vmatpush1.msra.mxu0 0.0
    %138 = vmatprep.subr.mxu0 0.0
    %139 = vmatpush1.msra.mxu0 0.0
    %140 = vmatprep.subr.mxu0 0.0
    %141 = vmatpush1.msra.mxu0 0.0
    %142 = vmatprep.subr.mxu0 0.0
    %143 = vmatpush1.msra.mxu0 0.0
    %144 = vmatprep.subr.mxu0 0.0
    %145 = vmatpush1.msra.mxu0 0.0
    %146 = vmatprep.subr.mxu0 0.0
    %147 = vmatpush1.msra.mxu0 0.0
    %148 = vmatprep.subr.mxu0 0.0
    %149 = vmatpush1.msra.mxu0 0.0
    %150 = vmatprep.subr.mxu0 0.0
    %151 = vmatpush1.msra.mxu0 0.0
    %152 = vmatprep.subr.mxu0 0.0
    %153 = vmatpush1.msra.mxu0 0.0
    %154 = vmatprep.subr.mxu0 0.0
    %155 = vmatpush1.msra.mxu0 0.0
    %156 = vmatprep.subr.mxu0 0.0
    %157 = vmatpush1.msra.mxu0 0.0
    %158 = vmatprep.subr.mxu0 0.0
    %159 = vmatpush1.msra.mxu0 0.0
    %160 = vmatprep.subr.mxu0 0.0
    %161 = vmatpush1.msra.mxu0 0.0
    %162 = vmatprep.subr.mxu0 0.0
    %163 = vmatpush1.msra.mxu0 0.0
    %164 = vmatprep.subr.mxu0 0.0
    %165 = vmatpush1.msra.mxu0 0.0
    %166 = vmatprep.subr.mxu0 0.0
    %167 = vmatpush1.msra.mxu0 0.0
    %168 = vmatprep.subr.mxu0 0.0
    %169 = vmatpush1.msra.mxu0 0.0
    %170 = vmatprep.subr.mxu0 0.0
    %171 = vmatpush1.msra.mxu0 0.0
    %172 = vmatprep.subr.mxu0 0.0
    %173 = vmatpush1.msra.mxu0 0.0
    %174 = vmatprep.subr.mxu0 0.0
    %175 = vmatpush1.msra.mxu0 0.0
    %176 = vmatprep.subr.mxu0 0.0
    %177 = vmatpush1.msra.mxu0 0.0
    %178 = vmatprep.mubr.f32.mxu0 0.0
    %179 = vmatmul.mubr.f32.gmra.mrb[0].mxu0 %v112
    %v180 = vpop.f32.mrb[0].mxu0
    %v181 = vadd.f32 0.0, %v180
    %v182 = vpop.f32.mrb[0].mxu0
    %v183 = vadd.f32 0.0, %v182
    %184 = vdwg.mxu0
    %v186 = vsel %vm110, %v99, 0
    %188 = vmatprep.subr.mxu0 %v102
    %189 = vmatpush1.msra.mxu0 %v101
    %190 = vmatprep.subr.mxu0 %v104
    %191 = vmatpush1.msra.mxu0 %v103
    %192 = vmatprep.subr.mxu0 0.0
    %193 = vmatpush1.msra.mxu0 0.0
    %194 = vmatprep.subr.mxu0 0.0
    %195 = vmatpush1.msra.mxu0 0.0
    %196 = vmatprep.subr.mxu0 0.0
    %197 = vmatpush1.msra.mxu0 0.0
    %198 = vmatprep.subr.mxu0 0.0
    %199 = vmatpush1.msra.mxu0 0.0
    %200 = vmatprep.subr.mxu0 0.0
    %201 = vmatpush1.msra.mxu0 0.0
    %202 = vmatprep.subr.mxu0 0.0
    %203 = vmatpush1.msra.mxu0 0.0
    %204 = vmatprep.subr.mxu0 0.0
    %205 = vmatpush1.msra.mxu0 0.0
    %206 = vmatprep.subr.mxu0 0.0
    %207 = vmatpush1.msra.mxu0 0.0
    %208 = vmatprep.subr.mxu0 0.0
    %209 = vmatpush1.msra.mxu0 0.0
    %210 = vmatprep.subr.mxu0 0.0
    %211 = vmatpush1.msra.mxu0 0.0
    %212 = vmatprep.subr.mxu0 0.0
    %213 = vmatpush1.msra.mxu0 0.0
    %214 = vmatprep.subr.mxu0 0.0
    %215 = vmatpush1.msra.mxu0 0.0
    %216 = vmatprep.subr.mxu0 0.0
    %217 = vmatpush1.msra.mxu0 0.0
    %218 = vmatprep.subr.mxu0 0.0
    %219 = vmatpush1.msra.mxu0 0.0
    %220 = vmatprep.subr.mxu0 0.0
    %221 = vmatpush1.msra.mxu0 0.0
    %222 = vmatprep.subr.mxu0 0.0
    %223 = vmatpush1.msra.mxu0 0.0
    %224 = vmatprep.subr.mxu0 0.0
    %225 = vmatpush1.msra.mxu0 0.0
    %226 = vmatprep.subr.mxu0 0.0
    %227 = vmatpush1.msra.mxu0 0.0
    %228 = vmatprep.subr.mxu0 0.0
    %229 = vmatpush1.msra.mxu0 0.0
    %230 = vmatprep.subr.mxu0 0.0
    %231 = vmatpush1.msra.mxu0 0.0
    %232 = vmatprep.subr.mxu0 0.0
    %233 = vmatpush1.msra.mxu0 0.0
    %234 = vmatprep.subr.mxu0 0.0
    %235 = vmatpush1.msra.mxu0 0.0
    %236 = vmatprep.subr.mxu0 0.0
    %237 = vmatpush1.msra.mxu0 0.0
    %238 = vmatprep.subr.mxu0 0.0
    %239 = vmatpush1.msra.mxu0 0.0
    %240 = vmatprep.subr.mxu0 0.0
    %241 = vmatpush1.msra.mxu0 0.0
    %242 = vmatprep.subr.mxu0 0.0
    %243 = vmatpush1.msra.mxu0 0.0
    %244 = vmatprep.subr.mxu0 0.0
    %245 = vmatpush1.msra.mxu0 0.0
    %246 = vmatprep.subr.mxu0 0.0
    %247 = vmatpush1.msra.mxu0 0.0
    %248 = vmatprep.subr.mxu0 0.0
    %249 = vmatpush1.msra.mxu0 0.0
    %250 = vmatprep.subr.mxu0 0.0
    %251 = vmatpush1.msra.mxu0 0.0
    %252 = vmatprep.mubr.f32.mxu0 0.0
    %253 = vmatmul.mubr.f32.gmra.mrb[0].mxu0 %v186
    %v254 = vpop.f32.mrb[0].mxu0
    %v255 = vadd.f32 %v181, %v254
    %v256 = vpop.f32.mrb[0].mxu0
    %v257 = vadd.f32 %v183, %v256
    %258 = vdwg.mxu0
    %v259 = vld [vmem:[%s4] sm:$0x3]
    %v261 = vlaneseq
    %v262 = vshrl.u32 %v261, 7
    %v263 = vsub.s32 0, %v262
    %v264 = vrot.slane %v259, %v263
    %v265 = vlaneseq
    %v266 = vshrl.u32 %v265, 7
    %v267 = vsub.s32 1, %v266
    %v268 = vrot.slane %v259, %v267
    %v271 = vadd.f32 %v255, %v264
    %v272 = vadd.f32 %v257, %v268
    %v273 = vld [vmem:[#allocation6] sm:$0xff]
    %v274 = vld [vmem:[#allocation6 + $0x8] sm:$0xff]
    %v275 = vld [vmem:[#allocation6 + $0x10] sm:$0xff]
    %v276 = vld [vmem:[#allocation6 + $0x18] sm:$0xff]
    %v277 = vld [vmem:[#allocation6 + $0x20] sm:$0xff]
    %v278 = vld [vmem:[#allocation6 + $0x28] sm:$0xff]
    %v279 = vld [vmem:[#allocation6 + $0x30] sm:$0xff]
    %v280 = vld [vmem:[#allocation6 + $0x38] sm:$0xff]
    %v281 = vld [vmem:[#allocation6 + $0x40] sm:$0xff]
    %v282 = vld [vmem:[#allocation6 + $0x48] sm:$0xff]
    %v283 = vld [vmem:[#allocation6 + $0x50] sm:$0xff]
    %v284 = vld [vmem:[#allocation6 + $0x58] sm:$0xff]
    %v285 = vld [vmem:[#allocation6 + $0x60] sm:$0xff]
    %v286 = vld [vmem:[#allocation6 + $0x68] sm:$0xff]
    %v287 = vld [vmem:[#allocation6 + $0x70] sm:$0xff]
    %v288 = vld [vmem:[#allocation6 + $0x78] sm:$0xff]
    %v289 = vld [vmem:[%s5] sm:$0x1]
    %vm290 = vcmask 523264
    %v292 = vsel %vm290, 0.0, 0
    %294 = vmatprep.subr.mxu0 %v274
    %295 = vmatpush1.msra.mxu0 %v273
    %296 = vmatprep.subr.mxu0 %v276
    %297 = vmatpush1.msra.mxu0 %v275
    %298 = vmatprep.subr.mxu0 %v278
    %299 = vmatpush1.msra.mxu0 %v277
    %300 = vmatprep.subr.mxu0 %v280
    %301 = vmatpush1.msra.mxu0 %v279
    %302 = vmatprep.subr.mxu0 %v282
    %303 = vmatpush1.msra.mxu0 %v281
    %304 = vmatprep.subr.mxu0 %v284
    %305 = vmatpush1.msra.mxu0 %v283
    %306 = vmatprep.subr.mxu0 %v286
    %307 = vmatpush1.msra.mxu0 %v285
    %308 = vmatprep.subr.mxu0 %v288
    %309 = vmatpush1.msra.mxu0 %v287
    %310 = vmatprep.subr.mxu0 0.0
    %311 = vmatpush1.msra.mxu0 0.0
    %312 = vmatprep.subr.mxu0 0.0
    %313 = vmatpush1.msra.mxu0 0.0
    %314 = vmatprep.subr.mxu0 0.0
    %315 = vmatpush1.msra.mxu0 0.0
    %316 = vmatprep.subr.mxu0 0.0
    %317 = vmatpush1.msra.mxu0 0.0
    %318 = vmatprep.subr.mxu0 0.0
    %319 = vmatpush1.msra.mxu0 0.0
    %320 = vmatprep.subr.mxu0 0.0
    %321 = vmatpush1.msra.mxu0 0.0
    %322 = vmatprep.subr.mxu0 0.0
    %323 = vmatpush1.msra.mxu0 0.0
    %324 = vmatprep.subr.mxu0 0.0
    %325 = vmatpush1.msra.mxu0 0.0
    %326 = vmatprep.subr.mxu0 0.0
    %327 = vmatpush1.msra.mxu0 0.0
    %328 = vmatprep.subr.mxu0 0.0
    %329 = vmatpush1.msra.mxu0 0.0
    %330 = vmatprep.subr.mxu0 0.0
    %331 = vmatpush1.msra.mxu0 0.0
    %332 = vmatprep.subr.mxu0 0.0
    %333 = vmatpush1.msra.mxu0 0.0
    %334 = vmatprep.subr.mxu0 0.0
    %335 = vmatpush1.msra.mxu0 0.0
    %336 = vmatprep.subr.mxu0 0.0
    %337 = vmatpush1.msra.mxu0 0.0
    %338 = vmatprep.subr.mxu0 0.0
    %339 = vmatpush1.msra.mxu0 0.0
    %340 = vmatprep.subr.mxu0 0.0
    %341 = vmatpush1.msra.mxu0 0.0
    %342 = vmatprep.subr.mxu0 0.0
    %343 = vmatpush1.msra.mxu0 0.0
    %344 = vmatprep.subr.mxu0 0.0
    %345 = vmatpush1.msra.mxu0 0.0
    %346 = vmatprep.subr.mxu0 0.0
    %347 = vmatpush1.msra.mxu0 0.0
    %348 = vmatprep.subr.mxu0 0.0
    %349 = vmatpush1.msra.mxu0 0.0
    %350 = vmatprep.subr.mxu0 0.0
    %351 = vmatpush1.msra.mxu0 0.0
    %352 = vmatprep.subr.mxu0 0.0
    %353 = vmatpush1.msra.mxu0 0.0
    %354 = vmatprep.subr.mxu0 0.0
    %355 = vmatpush1.msra.mxu0 0.0
    %356 = vmatprep.subr.mxu0 0.0
    %357 = vmatpush1.msra.mxu0 0.0
    %358 = vmatprep.mubr.f32.mxu0 0.0
    %359 = vmatmul.mubr.f32.gmra.mrb[0].mxu0 %v292
    %v360 = vpop.f32.mrb[0].mxu0
    %v361 = vadd.f32 0.0, %v360
    %v362 = vpop.f32.mrb[0].mxu0
    %v363 = vadd.f32 0.0, %v362
    %364 = vdwg.mxu0
    %v365 = vadd.f32 %v271, %v361
    %v366 = vxor.u32 %v365, 2147483648
    %v367 = vmul.f32 %v366, 1.442695
    %v368 = vpow.pop %v367
    %v369 = vadd.f32 %v368, 1.0
    %v370 = vrcp.pop %v369
    %v371 = vmul.f32 1.0, %v370
    %v372 = vadd.f32 %v363, %v289
    %v373 = vmul.f32 %v371, %v372
    %v374 = vadd.f32 %v272, %v373
    %v375 = vtanh.pop %v374
    %v376 = vsub.f32 1.0, %v371
    %378 = vrot.lane.b32.xlu0 %v375, 64
    %v379 = vpop.permute.xlu0 %378
    %v381 = vmul.f32 %v376, %v379
    %v382 = vmul.f32 %v371, 0.0
    %v383 = vadd.f32 %v381, %v382
    %385 = vrot.lane.b32.xlu0 %v383, 64
    %v386 = vpop.permute.xlu0 %385
    %v387 = vsel %vm290, %v386, 0
    %389 = vmatprep.subr.mxu0 %v274
    %390 = vmatpush1.msra.mxu0 %v273
    %391 = vmatprep.subr.mxu0 %v276
    %392 = vmatpush1.msra.mxu0 %v275
    %393 = vmatprep.subr.mxu0 %v278
    %394 = vmatpush1.msra.mxu0 %v277
    %395 = vmatprep.subr.mxu0 %v280
    %396 = vmatpush1.msra.mxu0 %v279
    %397 = vmatprep.subr.mxu0 %v282
    %398 = vmatpush1.msra.mxu0 %v281
    %399 = vmatprep.subr.mxu0 %v284
    %400 = vmatpush1.msra.mxu0 %v283
    %401 = vmatprep.subr.mxu0 %v286
    %402 = vmatpush1.msra.mxu0 %v285
    %403 = vmatprep.subr.mxu0 %v288
    %404 = vmatpush1.msra.mxu0 %v287
    %405 = vmatprep.subr.mxu0 0.0
    %406 = vmatpush1.msra.mxu0 0.0
    %407 = vmatprep.subr.mxu0 0.0
    %408 = vmatpush1.msra.mxu0 0.0
    %409 = vmatprep.subr.mxu0 0.0
    %410 = vmatpush1.msra.mxu0 0.0
    %411 = vmatprep.subr.mxu0 0.0
    %412 = vmatpush1.msra.mxu0 0.0
    %413 = vmatprep.subr.mxu0 0.0
    %414 = vmatpush1.msra.mxu0 0.0
    %415 = vmatprep.subr.mxu0 0.0
    %416 = vmatpush1.msra.mxu0 0.0
    %417 = vmatprep.subr.mxu0 0.0
    %418 = vmatpush1.msra.mxu0 0.0
    %419 = vmatprep.subr.mxu0 0.0
    %420 = vmatpush1.msra.mxu0 0.0
    %421 = vmatprep.subr.mxu0 0.0
    %422 = vmatpush1.msra.mxu0 0.0
    %423 = vmatprep.subr.mxu0 0.0
    %424 = vmatpush1.msra.mxu0 0.0
    %425 = vmatprep.subr.mxu0 0.0
    %426 = vmatpush1.msra.mxu0 0.0
    %427 = vmatprep.subr.mxu0 0.0
    %428 = vmatpush1.msra.mxu0 0.0
    %429 = vmatprep.subr.mxu0 0.0
    %430 = vmatpush1.msra.mxu0 0.0
    %431 = vmatprep.subr.mxu0 0.0
    %432 = vmatpush1.msra.mxu0 0.0
    %433 = vmatprep.subr.mxu0 0.0
    %434 = vmatpush1.msra.mxu0 0.0
    %435 = vmatprep.subr.mxu0 0.0
    %436 = vmatpush1.msra.mxu0 0.0
    %437 = vmatprep.subr.mxu0 0.0
    %438 = vmatpush1.msra.mxu0 0.0
    %439 = vmatprep.subr.mxu0 0.0
    %440 = vmatpush1.msra.mxu0 0.0
    %441 = vmatprep.subr.mxu0 0.0
    %442 = vmatpush1.msra.mxu0 0.0
    %443 = vmatprep.subr.mxu0 0.0
    %444 = vmatpush1.msra.mxu0 0.0
    %445 = vmatprep.subr.mxu0 0.0
    %446 = vmatpush1.msra.mxu0 0.0
    %447 = vmatprep.subr.mxu0 0.0
    %448 = vmatpush1.msra.mxu0 0.0
    %449 = vmatprep.subr.mxu0 0.0
    %450 = vmatpush1.msra.mxu0 0.0
    %451 = vmatprep.subr.mxu0 0.0
    %452 = vmatpush1.msra.mxu0 0.0
    %453 = vmatprep.mubr.f32.mxu0 0.0
    %454 = vmatmul.mubr.f32.gmra.mrb[0].mxu0 %v387
    %v455 = vpop.f32.mrb[0].mxu0
    %v456 = vadd.f32 0.0, %v455
    %v457 = vpop.f32.mrb[0].mxu0
    %v458 = vadd.f32 0.0, %v457
    %459 = vdwg.mxu0
    %v461 = vrot.slane %v456, 7
    %v463 = vadd.f32 %v271, %v461
    %v464 = vxor.u32 %v463, 2147483648
    %v465 = vmul.f32 %v464, 1.442695
    %v466 = vpow.pop %v465
    %v467 = vadd.f32 %v466, 1.0
    %v468 = vrcp.pop %v467
    %v469 = vmul.f32 1.0, %v468
    %v470 = vadd.f32 %v458, %v289
    %v472 = vrot.slane %v470, 7
    %v474 = vmul.f32 %v469, %v472
    %v475 = vadd.f32 %v272, %v474
    %v476 = vtanh.pop %v475
    %v477 = vsub.f32 1.0, %v469
    %479 = vrot.lane.b32.xlu0 %v476, 64
    %v480 = vpop.permute.xlu0 %479
    %v482 = vmul.f32 %v477, %v480
    %v483 = vrot.slane %v383, 7
    %v485 = vmul.f32 %v469, %v483
    %v486 = vadd.f32 %v482, %v485
    %v488 = vrot.slane %v486, 1
    %489 = vrot.lane.b32.xlu0 %v488, 64
    %v490 = vpop.permute.xlu0 %489
    %v491 = vsel %vm290, %v490, 0
    %493 = vmatprep.subr.mxu0 %v274
    %494 = vmatpush1.msra.mxu0 %v273
    %495 = vmatprep.subr.mxu0 %v276
    %496 = vmatpush1.msra.mxu0 %v275
    %497 = vmatprep.subr.mxu0 %v278
    %498 = vmatpush1.msra.mxu0 %v277
    %499 = vmatprep.subr.mxu0 %v280
    %500 = vmatpush1.msra.mxu0 %v279
    %501 = vmatprep.subr.mxu0 %v282
    %502 = vmatpush1.msra.mxu0 %v281
    %503 = vmatprep.subr.mxu0 %v284
    %504 = vmatpush1.msra.mxu0 %v283
    %505 = vmatprep.subr.mxu0 %v286
    %506 = vmatpush1.msra.mxu0 %v285
    %507 = vmatprep.subr.mxu0 %v288
    %508 = vmatpush1.msra.mxu0 %v287
    %509 = vmatprep.subr.mxu0 0.0
    %510 = vmatpush1.msra.mxu0 0.0
    %511 = vmatprep.subr.mxu0 0.0
    %512 = vmatpush1.msra.mxu0 0.0
    %513 = vmatprep.subr.mxu0 0.0
    %514 = vmatpush1.msra.mxu0 0.0
    %515 = vmatprep.subr.mxu0 0.0
    %516 = vmatpush1.msra.mxu0 0.0
    %517 = vmatprep.subr.mxu0 0.0
    %518 = vmatpush1.msra.mxu0 0.0
    %519 = vmatprep.subr.mxu0 0.0
    %520 = vmatpush1.msra.mxu0 0.0
    %521 = vmatprep.subr.mxu0 0.0
    %522 = vmatpush1.msra.mxu0 0.0
    %523 = vmatprep.subr.mxu0 0.0
    %524 = vmatpush1.msra.mxu0 0.0
    %525 = vmatprep.subr.mxu0 0.0
    %526 = vmatpush1.msra.mxu0 0.0
    %527 = vmatprep.subr.mxu0 0.0
    %528 = vmatpush1.msra.mxu0 0.0
    %529 = vmatprep.subr.mxu0 0.0
    %530 = vmatpush1.msra.mxu0 0.0
    %531 = vmatprep.subr.mxu0 0.0
    %532 = vmatpush1.msra.mxu0 0.0
    %533 = vmatprep.subr.mxu0 0.0
    %534 = vmatpush1.msra.mxu0 0.0
    %535 = vmatprep.subr.mxu0 0.0
    %536 = vmatpush1.msra.mxu0 0.0
    %537 = vmatprep.subr.mxu0 0.0
    %538 = vmatpush1.msra.mxu0 0.0
    %539 = vmatprep.subr.mxu0 0.0
    %540 = vmatpush1.msra.mxu0 0.0
    %541 = vmatprep.subr.mxu0 0.0
    %542 = vmatpush1.msra.mxu0 0.0
    %543 = vmatprep.subr.mxu0 0.0
    %544 = vmatpush1.msra.mxu0 0.0
    %545 = vmatprep.subr.mxu0 0.0
    %546 = vmatpush1.msra.mxu0 0.0
    %547 = vmatprep.subr.mxu0 0.0
    %548 = vmatpush1.msra.mxu0 0.0
    %549 = vmatprep.subr.mxu0 0.0
    %550 = vmatpush1.msra.mxu0 0.0
    %551 = vmatprep.subr.mxu0 0.0
    %552 = vmatpush1.msra.mxu0 0.0
    %553 = vmatprep.subr.mxu0 0.0
    %554 = vmatpush1.msra.mxu0 0.0
    %555 = vmatprep.subr.mxu0 0.0
    %556 = vmatpush1.msra.mxu0 0.0
    %557 = vmatprep.mubr.f32.mxu0 0.0
    %558 = vmatmul.mubr.f32.gmra.mrb[0].mxu0 %v491
    %v559 = vpop.f32.mrb[0].mxu0
    %v560 = vadd.f32 0.0, %v559
    %v561 = vpop.f32.mrb[0].mxu0
    %v562 = vadd.f32 0.0, %v561
    %563 = vdwg.mxu0
    %v565 = vrot.slane %v560, 6
    %v567 = vadd.f32 %v271, %v565
    %v568 = vxor.u32 %v567, 2147483648
    %v569 = vmul.f32 %v568, 1.442695
    %v570 = vpow.pop %v569
    %v571 = vadd.f32 %v570, 1.0
    %v572 = vrcp.pop %v571
    %v573 = vmul.f32 1.0, %v572
    %v574 = vadd.f32 %v562, %v289
    %v576 = vrot.slane %v574, 6
    %v578 = vmul.f32 %v573, %v576
    %v579 = vadd.f32 %v272, %v578
    %v580 = vtanh.pop %v579
    %v581 = vsub.f32 1.0, %v573
    %583 = vrot.lane.b32.xlu0 %v580, 64
    %v584 = vpop.permute.xlu0 %583
    %v586 = vmul.f32 %v581, %v584
    %v587 = vrot.slane %v486, 7
    %v589 = vmul.f32 %v573, %v587
    %v590 = vadd.f32 %v586, %v589
    %v592 = vrot.slane %v590, 2
    %593 = vrot.lane.b32.xlu0 %v592, 64
    %v594 = vpop.permute.xlu0 %593
    %v595 = vsel %vm290, %v594, 0
    %597 = vmatprep.subr.mxu0 %v274
    %598 = vmatpush1.msra.mxu0 %v273
    %599 = vmatprep.subr.mxu0 %v276
    %600 = vmatpush1.msra.mxu0 %v275
    %601 = vmatprep.subr.mxu0 %v278
    %602 = vmatpush1.msra.mxu0 %v277
    %603 = vmatprep.subr.mxu0 %v280
    %604 = vmatpush1.msra.mxu0 %v279
    %605 = vmatprep.subr.mxu0 %v282
    %606 = vmatpush1.msra.mxu0 %v281
    %607 = vmatprep.subr.mxu0 %v284
    %608 = vmatpush1.msra.mxu0 %v283
    %609 = vmatprep.subr.mxu0 %v286
    %610 = vmatpush1.msra.mxu0 %v285
    %611 = vmatprep.subr.mxu0 %v288
    %612 = vmatpush1.msra.mxu0 %v287
    %613 = vmatprep.subr.mxu0 0.0
    %614 = vmatpush1.msra.mxu0 0.0
    %615 = vmatprep.subr.mxu0 0.0
    %616 = vmatpush1.msra.mxu0 0.0
    %617 = vmatprep.subr.mxu0 0.0
    %618 = vmatpush1.msra.mxu0 0.0
    %619 = vmatprep.subr.mxu0 0.0
    %620 = vmatpush1.msra.mxu0 0.0
    %621 = vmatprep.subr.mxu0 0.0
    %622 = vmatpush1.msra.mxu0 0.0
    %623 = vmatprep.subr.mxu0 0.0
    %624 = vmatpush1.msra.mxu0 0.0
    %625 = vmatprep.subr.mxu0 0.0
    %626 = vmatpush1.msra.mxu0 0.0
    %627 = vmatprep.subr.mxu0 0.0
    %628 = vmatpush1.msra.mxu0 0.0
    %629 = vmatprep.subr.mxu0 0.0
    %630 = vmatpush1.msra.mxu0 0.0
    %631 = vmatprep.subr.mxu0 0.0
    %632 = vmatpush1.msra.mxu0 0.0
    %633 = vmatprep.subr.mxu0 0.0
    %634 = vmatpush1.msra.mxu0 0.0
    %635 = vmatprep.subr.mxu0 0.0
    %636 = vmatpush1.msra.mxu0 0.0
    %637 = vmatprep.subr.mxu0 0.0
    %638 = vmatpush1.msra.mxu0 0.0
    %639 = vmatprep.subr.mxu0 0.0
    %640 = vmatpush1.msra.mxu0 0.0
    %641 = vmatprep.subr.mxu0 0.0
    %642 = vmatpush1.msra.mxu0 0.0
    %643 = vmatprep.subr.mxu0 0.0
    %644 = vmatpush1.msra.mxu0 0.0
    %645 = vmatprep.subr.mxu0 0.0
    %646 = vmatpush1.msra.mxu0 0.0
    %647 = vmatprep.subr.mxu0 0.0
    %648 = vmatpush1.msra.mxu0 0.0
    %649 = vmatprep.subr.mxu0 0.0
    %650 = vmatpush1.msra.mxu0 0.0
    %651 = vmatprep.subr.mxu0 0.0
    %652 = vmatpush1.msra.mxu0 0.0
    %653 = vmatprep.subr.mxu0 0.0
    %654 = vmatpush1.msra.mxu0 0.0
    %655 = vmatprep.subr.mxu0 0.0
    %656 = vmatpush1.msra.mxu0 0.0
    %657 = vmatprep.subr.mxu0 0.0
    %658 = vmatpush1.msra.mxu0 0.0
    %659 = vmatprep.subr.mxu0 0.0
    %660 = vmatpush1.msra.mxu0 0.0
    %661 = vmatprep.mubr.f32.mxu0 0.0
    %662 = vmatmul.mubr.f32.gmra.mrb[0].mxu0 %v595
    %v663 = vpop.f32.mrb[0].mxu0
    %v664 = vadd.f32 0.0, %v663
    %v665 = vpop.f32.mrb[0].mxu0
    %v666 = vadd.f32 0.0, %v665
    %667 = vdwg.mxu0
    %v669 = vrot.slane %v664, 5
    %v671 = vadd.f32 %v271, %v669
    %v672 = vxor.u32 %v671, 2147483648
    %v673 = vmul.f32 %v672, 1.442695
    %v674 = vpow.pop %v673
    %v675 = vadd.f32 %v674, 1.0
    %v676 = vrcp.pop %v675
    %v677 = vmul.f32 1.0, %v676
    %v678 = vadd.f32 %v666, %v289
    %v680 = vrot.slane %v678, 5
    %v682 = vmul.f32 %v677, %v680
    %v683 = vadd.f32 %v272, %v682
    %v684 = vtanh.pop %v683
    %v685 = vsub.f32 1.0, %v677
    %687 = vrot.lane.b32.xlu0 %v684, 64
    %v688 = vpop.permute.xlu0 %687
    %v690 = vmul.f32 %v685, %v688
    %v691 = vrot.slane %v590, 7
    %v693 = vmul.f32 %v677, %v691
    %v694 = vadd.f32 %v690, %v693
    %v696 = vrot.slane %v694, 3
    %697 = vrot.lane.b32.xlu0 %v696, 64
    %v698 = vpop.permute.xlu0 %697
    %v699 = vsel %vm290, %v698, 0
    %701 = vmatprep.subr.mxu0 %v274
    %702 = vmatpush1.msra.mxu0 %v273
    %703 = vmatprep.subr.mxu0 %v276
    %704 = vmatpush1.msra.mxu0 %v275
    %705 = vmatprep.subr.mxu0 %v278
    %706 = vmatpush1.msra.mxu0 %v277
    %707 = vmatprep.subr.mxu0 %v280
    %708 = vmatpush1.msra.mxu0 %v279
    %709 = vmatprep.subr.mxu0 %v282
    %710 = vmatpush1.msra.mxu0 %v281
    %711 = vmatprep.subr.mxu0 %v284
    %712 = vmatpush1.msra.mxu0 %v283
    %713 = vmatprep.subr.mxu0 %v286
    %714 = vmatpush1.msra.mxu0 %v285
    %715 = vmatprep.subr.mxu0 %v288
    %716 = vmatpush1.msra.mxu0 %v287
    %717 = vmatprep.subr.mxu0 0.0
    %718 = vmatpush1.msra.mxu0 0.0
    %719 = vmatprep.subr.mxu0 0.0
    %720 = vmatpush1.msra.mxu0 0.0
    %721 = vmatprep.subr.mxu0 0.0
    %722 = vmatpush1.msra.mxu0 0.0
    %723 = vmatprep.subr.mxu0 0.0
    %724 = vmatpush1.msra.mxu0 0.0
    %725 = vmatprep.subr.mxu0 0.0
    %726 = vmatpush1.msra.mxu0 0.0
    %727 = vmatprep.subr.mxu0 0.0
    %728 = vmatpush1.msra.mxu0 0.0
    %729 = vmatprep.subr.mxu0 0.0
    %730 = vmatpush1.msra.mxu0 0.0
    %731 = vmatprep.subr.mxu0 0.0
    %732 = vmatpush1.msra.mxu0 0.0
    %733 = vmatprep.subr.mxu0 0.0
    %734 = vmatpush1.msra.mxu0 0.0
    %735 = vmatprep.subr.mxu0 0.0
    %736 = vmatpush1.msra.mxu0 0.0
    %737 = vmatprep.subr.mxu0 0.0
    %738 = vmatpush1.msra.mxu0 0.0
    %739 = vmatprep.subr.mxu0 0.0
    %740 = vmatpush1.msra.mxu0 0.0
    %741 = vmatprep.subr.mxu0 0.0
    %742 = vmatpush1.msra.mxu0 0.0
    %743 = vmatprep.subr.mxu0 0.0
    %744 = vmatpush1.msra.mxu0 0.0
    %745 = vmatprep.subr.mxu0 0.0
    %746 = vmatpush1.msra.mxu0 0.0
    %747 = vmatprep.subr.mxu0 0.0
    %748 = vmatpush1.msra.mxu0 0.0
    %749 = vmatprep.subr.mxu0 0.0
    %750 = vmatpush1.msra.mxu0 0.0
    %751 = vmatprep.subr.mxu0 0.0
    %752 = vmatpush1.msra.mxu0 0.0
    %753 = vmatprep.subr.mxu0 0.0
    %754 = vmatpush1.msra.mxu0 0.0
    %755 = vmatprep.subr.mxu0 0.0
    %756 = vmatpush1.msra.mxu0 0.0
    %757 = vmatprep.subr.mxu0 0.0
    %758 = vmatpush1.msra.mxu0 0.0
    %759 = vmatprep.subr.mxu0 0.0
    %760 = vmatpush1.msra.mxu0 0.0
    %761 = vmatprep.subr.mxu0 0.0
    %762 = vmatpush1.msra.mxu0 0.0
    %763 = vmatprep.subr.mxu0 0.0
    %764 = vmatpush1.msra.mxu0 0.0
    %765 = vmatprep.mubr.f32.mxu0 0.0
    %766 = vmatmul.mubr.f32.gmra.mrb[0].mxu0 %v699
    %v767 = vpop.f32.mrb[0].mxu0
    %v768 = vadd.f32 0.0, %v767
    %v769 = vpop.f32.mrb[0].mxu0
    %v770 = vadd.f32 0.0, %v769
    %771 = vdwg.mxu0
    %v773 = vrot.slane %v768, 4
    %v775 = vadd.f32 %v271, %v773
    %v776 = vxor.u32 %v775, 2147483648
    %v777 = vmul.f32 %v776, 1.442695
    %v778 = vpow.pop %v777
    %v779 = vadd.f32 %v778, 1.0
    %v780 = vrcp.pop %v779
    %v781 = vmul.f32 1.0, %v780
    %v782 = vadd.f32 %v770, %v289
    %v784 = vrot.slane %v782, 4
    %v786 = vmul.f32 %v781, %v784
    %v787 = vadd.f32 %v272, %v786
    %v788 = vtanh.pop %v787
    %v789 = vsub.f32 1.0, %v781
    %791 = vrot.lane.b32.xlu0 %v788, 64
    %v792 = vpop.permute.xlu0 %791
    %v794 = vmul.f32 %v789, %v792
    %v795 = vrot.slane %v694, 7
    %v797 = vmul.f32 %v781, %v795
    %v798 = vadd.f32 %v794, %v797
    %v800 = vrot.slane %v798, 4
    %801 = vrot.lane.b32.xlu0 %v800, 64
    %v802 = vpop.permute.xlu0 %801
    %v803 = vsel %vm290, %v802, 0
    %805 = vmatprep.subr.mxu0 %v274
    %806 = vmatpush1.msra.mxu0 %v273
    %807 = vmatprep.subr.mxu0 %v276
    %808 = vmatpush1.msra.mxu0 %v275
    %809 = vmatprep.subr.mxu0 %v278
    %810 = vmatpush1.msra.mxu0 %v277
    %811 = vmatprep.subr.mxu0 %v280
    %812 = vmatpush1.msra.mxu0 %v279
    %813 = vmatprep.subr.mxu0 %v282
    %814 = vmatpush1.msra.mxu0 %v281
    %815 = vmatprep.subr.mxu0 %v284
    %816 = vmatpush1.msra.mxu0 %v283
    %817 = vmatprep.subr.mxu0 %v286
    %818 = vmatpush1.msra.mxu0 %v285
    %819 = vmatprep.subr.mxu0 %v288
    %820 = vmatpush1.msra.mxu0 %v287
    %821 = vmatprep.subr.mxu0 0.0
    %822 = vmatpush1.msra.mxu0 0.0
    %823 = vmatprep.subr.mxu0 0.0
    %824 = vmatpush1.msra.mxu0 0.0
    %825 = vmatprep.subr.mxu0 0.0
    %826 = vmatpush1.msra.mxu0 0.0
    %827 = vmatprep.subr.mxu0 0.0
    %828 = vmatpush1.msra.mxu0 0.0
    %829 = vmatprep.subr.mxu0 0.0
    %830 = vmatpush1.msra.mxu0 0.0
    %831 = vmatprep.subr.mxu0 0.0
    %832 = vmatpush1.msra.mxu0 0.0
    %833 = vmatprep.subr.mxu0 0.0
    %834 = vmatpush1.msra.mxu0 0.0
    %835 = vmatprep.subr.mxu0 0.0
    %836 = vmatpush1.msra.mxu0 0.0
    %837 = vmatprep.subr.mxu0 0.0
    %838 = vmatpush1.msra.mxu0 0.0
    %839 = vmatprep.subr.mxu0 0.0
    %840 = vmatpush1.msra.mxu0 0.0
    %841 = vmatprep.subr.mxu0 0.0
    %842 = vmatpush1.msra.mxu0 0.0
    %843 = vmatprep.subr.mxu0 0.0
    %844 = vmatpush1.msra.mxu0 0.0
    %845 = vmatprep.subr.mxu0 0.0
    %846 = vmatpush1.msra.mxu0 0.0
    %847 = vmatprep.subr.mxu0 0.0
    %848 = vmatpush1.msra.mxu0 0.0
    %849 = vmatprep.subr.mxu0 0.0
    %850 = vmatpush1.msra.mxu0 0.0
    %851 = vmatprep.subr.mxu0 0.0
    %852 = vmatpush1.msra.mxu0 0.0
    %853 = vmatprep.subr.mxu0 0.0
    %854 = vmatpush1.msra.mxu0 0.0
    %855 = vmatprep.subr.mxu0 0.0
    %856 = vmatpush1.msra.mxu0 0.0
    %857 = vmatprep.subr.mxu0 0.0
    %858 = vmatpush1.msra.mxu0 0.0
    %859 = vmatprep.subr.mxu0 0.0
    %860 = vmatpush1.msra.mxu0 0.0
    %861 = vmatprep.subr.mxu0 0.0
    %862 = vmatpush1.msra.mxu0 0.0
    %863 = vmatprep.subr.mxu0 0.0
    %864 = vmatpush1.msra.mxu0 0.0
    %865 = vmatprep.subr.mxu0 0.0
    %866 = vmatpush1.msra.mxu0 0.0
    %867 = vmatprep.subr.mxu0 0.0
    %868 = vmatpush1.msra.mxu0 0.0
    %869 = vmatprep.mubr.f32.mxu0 0.0
    %870 = vmatmul.mubr.f32.gmra.mrb[0].mxu0 %v803
    %v871 = vpop.f32.mrb[0].mxu0
    %v872 = vadd.f32 0.0, %v871
    %v873 = vpop.f32.mrb[0].mxu0
    %v874 = vadd.f32 0.0, %v873
    %875 = vdwg.mxu0
    %v877 = vrot.slane %v872, 3
    %v879 = vadd.f32 %v271, %v877
    %v880 = vxor.u32 %v879, 2147483648
    %v881 = vmul.f32 %v880, 1.442695
    %v882 = vpow.pop %v881
    %v883 = vadd.f32 %v882, 1.0
    %v884 = vrcp.pop %v883
    %v885 = vmul.f32 1.0, %v884
    %v886 = vadd.f32 %v874, %v289
    %v888 = vrot.slane %v886, 3
    %v890 = vmul.f32 %v885, %v888
    %v891 = vadd.f32 %v272, %v890
    %v892 = vtanh.pop %v891
    %v893 = vsub.f32 1.0, %v885
    %895 = vrot.lane.b32.xlu0 %v892, 64
    %v896 = vpop.permute.xlu0 %895
    %v898 = vmul.f32 %v893, %v896
    %v899 = vrot.slane %v798, 7
    %v901 = vmul.f32 %v885, %v899
    %v902 = vadd.f32 %v898, %v901
    %v904 = vrot.slane %v902, 5
    %905 = vrot.lane.b32.xlu0 %v904, 64
    %v906 = vpop.permute.xlu0 %905
    %v907 = vsel %vm290, %v906, 0
    %909 = vmatprep.subr.mxu0 %v274
    %910 = vmatpush1.msra.mxu0 %v273
    %911 = vmatprep.subr.mxu0 %v276
    %912 = vmatpush1.msra.mxu0 %v275
    %913 = vmatprep.subr.mxu0 %v278
    %914 = vmatpush1.msra.mxu0 %v277
    %915 = vmatprep.subr.mxu0 %v280
    %916 = vmatpush1.msra.mxu0 %v279
    %917 = vmatprep.subr.mxu0 %v282
    %918 = vmatpush1.msra.mxu0 %v281
    %919 = vmatprep.subr.mxu0 %v284
    %920 = vmatpush1.msra.mxu0 %v283
    %921 = vmatprep.subr.mxu0 %v286
    %922 = vmatpush1.msra.mxu0 %v285
    %923 = vmatprep.subr.mxu0 %v288
    %924 = vmatpush1.msra.mxu0 %v287
    %925 = vmatprep.subr.mxu0 0.0
    %926 = vmatpush1.msra.mxu0 0.0
    %927 = vmatprep.subr.mxu0 0.0
    %928 = vmatpush1.msra.mxu0 0.0
    %929 = vmatprep.subr.mxu0 0.0
    %930 = vmatpush1.msra.mxu0 0.0
    %931 = vmatprep.subr.mxu0 0.0
    %932 = vmatpush1.msra.mxu0 0.0
    %933 = vmatprep.subr.mxu0 0.0
    %934 = vmatpush1.msra.mxu0 0.0
    %935 = vmatprep.subr.mxu0 0.0
    %936 = vmatpush1.msra.mxu0 0.0
    %937 = vmatprep.subr.mxu0 0.0
    %938 = vmatpush1.msra.mxu0 0.0
    %939 = vmatprep.subr.mxu0 0.0
    %940 = vmatpush1.msra.mxu0 0.0
    %941 = vmatprep.subr.mxu0 0.0
    %942 = vmatpush1.msra.mxu0 0.0
    %943 = vmatprep.subr.mxu0 0.0
    %944 = vmatpush1.msra.mxu0 0.0
    %945 = vmatprep.subr.mxu0 0.0
    %946 = vmatpush1.msra.mxu0 0.0
    %947 = vmatprep.subr.mxu0 0.0
    %948 = vmatpush1.msra.mxu0 0.0
    %949 = vmatprep.subr.mxu0 0.0
    %950 = vmatpush1.msra.mxu0 0.0
    %951 = vmatprep.subr.mxu0 0.0
    %952 = vmatpush1.msra.mxu0 0.0
    %953 = vmatprep.subr.mxu0 0.0
    %954 = vmatpush1.msra.mxu0 0.0
    %955 = vmatprep.subr.mxu0 0.0
    %956 = vmatpush1.msra.mxu0 0.0
    %957 = vmatprep.subr.mxu0 0.0
    %958 = vmatpush1.msra.mxu0 0.0
    %959 = vmatprep.subr.mxu0 0.0
    %960 = vmatpush1.msra.mxu0 0.0
    %961 = vmatprep.subr.mxu0 0.0
    %962 = vmatpush1.msra.mxu0 0.0
    %963 = vmatprep.subr.mxu0 0.0
    %964 = vmatpush1.msra.mxu0 0.0
    %965 = vmatprep.subr.mxu0 0.0
    %966 = vmatpush1.msra.mxu0 0.0
    %967 = vmatprep.subr.mxu0 0.0
    %968 = vmatpush1.msra.mxu0 0.0
    %969 = vmatprep.subr.mxu0 0.0
    %970 = vmatpush1.msra.mxu0 0.0
    %971 = vmatprep.subr.mxu0 0.0
    %972 = vmatpush1.msra.mxu0 0.0
    %973 = vmatprep.mubr.f32.mxu0 0.0
    %974 = vmatmul.mubr.f32.gmra.mrb[0].mxu0 %v907
    %v975 = vpop.f32.mrb[0].mxu0
    %v976 = vadd.f32 0.0, %v975
    %v977 = vpop.f32.mrb[0].mxu0
    %v978 = vadd.f32 0.0, %v977
    %979 = vdwg.mxu0
    %v981 = vrot.slane %v976, 2
    %v983 = vadd.f32 %v271, %v981
    %v984 = vxor.u32 %v983, 2147483648
    %v985 = vmul.f32 %v984, 1.442695
    %v986 = vpow.pop %v985
    %v987 = vadd.f32 %v986, 1.0
    %v988 = vrcp.pop %v987
    %v989 = vmul.f32 1.0, %v988
    %v990 = vadd.f32 %v978, %v289
    %v992 = vrot.slane %v990, 2
    %v994 = vmul.f32 %v989, %v992
    %v995 = vadd.f32 %v272, %v994
    %v996 = vtanh.pop %v995
    %v997 = vsub.f32 1.0, %v989
    %999 = vrot.lane.b32.xlu0 %v996, 64
    %v1000 = vpop.permute.xlu0 %999
    %v1002 = vmul.f32 %v997, %v1000
    %v1003 = vrot.slane %v902, 7
    %v1005 = vmul.f32 %v989, %v1003
    %v1006 = vadd.f32 %v1002, %v1005
    %v1008 = vrot.slane %v1006, 6
    %1009 = vrot.lane.b32.xlu0 %v1008, 64
    %v1010 = vpop.permute.xlu0 %1009
    %v1011 = vsel %vm290, %v1010, 0
    %1013 = vmatprep.subr.mxu0 %v274
    %1014 = vmatpush1.msra.mxu0 %v273
    %1015 = vmatprep.subr.mxu0 %v276
    %1016 = vmatpush1.msra.mxu0 %v275
    %1017 = vmatprep.subr.mxu0 %v278
    %1018 = vmatpush1.msra.mxu0 %v277
    %1019 = vmatprep.subr.mxu0 %v280
    %1020 = vmatpush1.msra.mxu0 %v279
    %1021 = vmatprep.subr.mxu0 %v282
    %1022 = vmatpush1.msra.mxu0 %v281
    %1023 = vmatprep.subr.mxu0 %v284
    %1024 = vmatpush1.msra.mxu0 %v283
    %1025 = vmatprep.subr.mxu0 %v286
    %1026 = vmatpush1.msra.mxu0 %v285
    %1027 = vmatprep.subr.mxu0 %v288
    %1028 = vmatpush1.msra.mxu0 %v287
    %1029 = vmatprep.subr.mxu0 0.0
    %1030 = vmatpush1.msra.mxu0 0.0
    %1031 = vmatprep.subr.mxu0 0.0
    %1032 = vmatpush1.msra.mxu0 0.0
    %1033 = vmatprep.subr.mxu0 0.0
    %1034 = vmatpush1.msra.mxu0 0.0
    %1035 = vmatprep.subr.mxu0 0.0
    %1036 = vmatpush1.msra.mxu0 0.0
    %1037 = vmatprep.subr.mxu0 0.0
    %1038 = vmatpush1.msra.mxu0 0.0
    %1039 = vmatprep.subr.mxu0 0.0
    %1040 = vmatpush1.msra.mxu0 0.0
    %1041 = vmatprep.subr.mxu0 0.0
    %1042 = vmatpush1.msra.mxu0 0.0
    %1043 = vmatprep.subr.mxu0 0.0
    %1044 = vmatpush1.msra.mxu0 0.0
    %1045 = vmatprep.subr.mxu0 0.0
    %1046 = vmatpush1.msra.mxu0 0.0
    %1047 = vmatprep.subr.mxu0 0.0
    %1048 = vmatpush1.msra.mxu0 0.0
    %1049 = vmatprep.subr.mxu0 0.0
    %1050 = vmatpush1.msra.mxu0 0.0
    %1051 = vmatprep.subr.mxu0 0.0
    %1052 = vmatpush1.msra.mxu0 0.0
    %1053 = vmatprep.subr.mxu0 0.0
    %1054 = vmatpush1.msra.mxu0 0.0
    %1055 = vmatprep.subr.mxu0 0.0
    %1056 = vmatpush1.msra.mxu0 0.0
    %1057 = vmatprep.subr.mxu0 0.0
    %1058 = vmatpush1.msra.mxu0 0.0
    %1059 = vmatprep.subr.mxu0 0.0
    %1060 = vmatpush1.msra.mxu0 0.0
    %1061 = vmatprep.subr.mxu0 0.0
    %1062 = vmatpush1.msra.mxu0 0.0
    %1063 = vmatprep.subr.mxu0 0.0
    %1064 = vmatpush1.msra.mxu0 0.0
    %1065 = vmatprep.subr.mxu0 0.0
    %1066 = vmatpush1.msra.mxu0 0.0
    %1067 = vmatprep.subr.mxu0 0.0
    %1068 = vmatpush1.msra.mxu0 0.0
    %1069 = vmatprep.subr.mxu0 0.0
    %1070 = vmatpush1.msra.mxu0 0.0
    %1071 = vmatprep.subr.mxu0 0.0
    %1072 = vmatpush1.msra.mxu0 0.0
    %1073 = vmatprep.subr.mxu0 0.0
    %1074 = vmatpush1.msra.mxu0 0.0
    %1075 = vmatprep.subr.mxu0 0.0
    %1076 = vmatpush1.msra.mxu0 0.0
    %1077 = vmatprep.mubr.f32.mxu0 0.0
    %1078 = vmatmul.mubr.f32.gmra.mrb[0].mxu0 %v1011
    %v1079 = vpop.f32.mrb[0].mxu0
    %v1080 = vadd.f32 0.0, %v1079
    %v1081 = vpop.f32.mrb[0].mxu0
    %v1082 = vadd.f32 0.0, %v1081
    %1083 = vdwg.mxu0
    %v1085 = vrot.slane %v1080, 1
    %v1087 = vadd.f32 %v271, %v1085
    %v1088 = vxor.u32 %v1087, 2147483648
    %v1089 = vmul.f32 %v1088, 1.442695
    %v1090 = vpow.pop %v1089
    %v1091 = vadd.f32 %v1090, 1.0
    %v1092 = vrcp.pop %v1091
    %v1093 = vmul.f32 1.0, %v1092
    %v1094 = vadd.f32 %v1082, %v289
    %v1096 = vrot.slane %v1094, 1
    %v1098 = vmul.f32 %v1093, %v1096
    %v1099 = vadd.f32 %v272, %v1098
    %v1100 = vtanh.pop %v1099
    %v1101 = vsub.f32 1.0, %v1093
    %1103 = vrot.lane.b32.xlu0 %v1100, 64
    %v1104 = vpop.permute.xlu0 %1103
    %v1106 = vmul.f32 %v1101, %v1104
    %v1107 = vrot.slane %v1006, 7
    %v1109 = vmul.f32 %v1093, %v1107
    %v1110 = vadd.f32 %v1106, %v1109
    %vm1111 = vcmask 1040384
    %v1112 = vsel %vm1111, %v383, %v486
    %vm1113 = vcmask 1041408
    %v1114 = vsel %vm1113, %v1112, %v590
    %vm1115 = vcmask 1042432
    %v1116 = vsel %vm1115, %v1114, %v694
    %vm1117 = vcmask 1043456
    %v1118 = vsel %vm1117, %v1116, %v798
    %vm1119 = vcmask 1044480
    %v1120 = vsel %vm1119, %v1118, %v902
    %vm1121 = vcmask 1045504
    %v1122 = vsel %vm1121, %v1120, %v1006
    %vm1123 = vcmask 1046528
    %v1124 = vsel %vm1123, %v1122, %v1110
    %v1126 = vrot.slane %v1110, 7
    %v1128 = vrot.slane %v1006, 5
    %v1130 = vrot.slane %v902, 3
    %v1132 = vrot.slane %v798, 1
    %v1134 = vrot.slane %v590, 5
    %v1136 = vrot.slane %v486, 3
    %v1138 = vrot.slane %v383, 1
    %v1140 = vsel %vm1111, %v1126, %v1128
    %v1141 = vsel %vm1113, %v1140, %v1130
    %v1142 = vsel %vm1115, %v1141, %v1132
    %v1143 = vsel %vm1117, %v1142, %v795
    %v1144 = vsel %vm1119, %v1143, %v1134
    %v1145 = vsel %vm1121, %v1144, %v1136
    %v1146 = vsel %vm1123, %v1145, %v1138
    %1148 = vrot.lane.b32.xlu0 %v1124, 64
    %v1149 = vpop.permute.xlu0 %1148
    %1152 = vrot.lane.b32.xlu0 %v1146, 64
    %v1153 = vpop.permute.xlu0 %1152
    %vm1155 = vcmask 261120
    %v1156 = vsel %vm1155, %v1149, %v1153
    %v1157 = vsel %vm1155, %v1153, %v1149
    %v1158 = vld [vmem:[#allocation8] sm:$0xff]
    %v1159 = vld [vmem:[#allocation8 + $0x8] sm:$0xff]
    %v1160 = vld [vmem:[#allocation8 + $0x10] sm:$0xff]
    %v1161 = vld [vmem:[#allocation8 + $0x18] sm:$0xff]
    %v1162 = vld [vmem:[#allocation8 + $0x20] sm:$0xff]
    %v1163 = vld [vmem:[#allocation8 + $0x28] sm:$0xff]
    %v1164 = vld [vmem:[#allocation8 + $0x30] sm:$0xff]
    %v1165 = vld [vmem:[#allocation8 + $0x38] sm:$0xff]
    %v1166 = vld [vmem:[#allocation8 + $0x40] sm:$0xff]
    %v1167 = vld [vmem:[#allocation8 + $0x48] sm:$0xff]
    %v1168 = vld [vmem:[#allocation8 + $0x50] sm:$0xff]
    %v1169 = vld [vmem:[#allocation8 + $0x58] sm:$0xff]
    %v1170 = vld [vmem:[#allocation8 + $0x60] sm:$0xff]
    %v1171 = vld [vmem:[#allocation8 + $0x68] sm:$0xff]
    %v1172 = vld [vmem:[#allocation8 + $0x70] sm:$0xff]
    %v1173 = vld [vmem:[#allocation8 + $0x78] sm:$0xff]
    %s1174 = scalar_lea.vmem [#allocation8], 128
    %v1175 = vld [vmem:[%s1174] sm:$0xff]
    %v1176 = vld [vmem:[%s1174 + $0x8] sm:$0xff]
    %v1177 = vld [vmem:[%s1174 + $0x10] sm:$0xff]
    %v1178 = vld [vmem:[%s1174 + $0x18] sm:$0xff]
    %v1179 = vld [vmem:[%s1174 + $0x20] sm:$0xff]
    %v1180 = vld [vmem:[%s1174 + $0x28] sm:$0xff]
    %v1181 = vld [vmem:[%s1174 + $0x30] sm:$0xff]
    %v1182 = vld [vmem:[%s1174 + $0x38] sm:$0xff]
    %v1183 = vld [vmem:[%s1174 + $0x40] sm:$0xff]
    %v1184 = vld [vmem:[%s1174 + $0x48] sm:$0xff]
    %v1185 = vld [vmem:[%s1174 + $0x50] sm:$0xff]
    %v1186 = vld [vmem:[%s1174 + $0x58] sm:$0xff]
    %v1187 = vld [vmem:[%s1174 + $0x60] sm:$0xff]
    %v1188 = vld [vmem:[%s1174 + $0x68] sm:$0xff]
    %v1189 = vld [vmem:[%s1174 + $0x70] sm:$0xff]
    %v1190 = vld [vmem:[%s1174 + $0x78] sm:$0xff]
    %v1192 = vsel %vm290, %v1157, 0
    %1194 = vmatprep.subr.mxu0 %v1176
    %1195 = vmatpush1.msra.mxu0 %v1175
    %1196 = vmatprep.subr.mxu0 %v1178
    %1197 = vmatpush1.msra.mxu0 %v1177
    %1198 = vmatprep.subr.mxu0 %v1180
    %1199 = vmatpush1.msra.mxu0 %v1179
    %1200 = vmatprep.subr.mxu0 %v1182
    %1201 = vmatpush1.msra.mxu0 %v1181
    %1202 = vmatprep.subr.mxu0 %v1184
    %1203 = vmatpush1.msra.mxu0 %v1183
    %1204 = vmatprep.subr.mxu0 %v1186
    %1205 = vmatpush1.msra.mxu0 %v1185
    %1206 = vmatprep.subr.mxu0 %v1188
    %1207 = vmatpush1.msra.mxu0 %v1187
    %1208 = vmatprep.subr.mxu0 %v1190
    %1209 = vmatpush1.msra.mxu0 %v1189
    %1210 = vmatprep.subr.mxu0 0.0
    %1211 = vmatpush1.msra.mxu0 0.0
    %1212 = vmatprep.subr.mxu0 0.0
    %1213 = vmatpush1.msra.mxu0 0.0
    %1214 = vmatprep.subr.mxu0 0.0
    %1215 = vmatpush1.msra.mxu0 0.0
    %1216 = vmatprep.subr.mxu0 0.0
    %1217 = vmatpush1.msra.mxu0 0.0
    %1218 = vmatprep.subr.mxu0 0.0
    %1219 = vmatpush1.msra.mxu0 0.0
    %1220 = vmatprep.subr.mxu0 0.0
    %1221 = vmatpush1.msra.mxu0 0.0
    %1222 = vmatprep.subr.mxu0 0.0
    %1223 = vmatpush1.msra.mxu0 0.0
    %1224 = vmatprep.subr.mxu0 0.0
    %1225 = vmatpush1.msra.mxu0 0.0
    %1226 = vmatprep.subr.mxu0 0.0
    %1227 = vmatpush1.msra.mxu0 0.0
    %1228 = vmatprep.subr.mxu0 0.0
    %1229 = vmatpush1.msra.mxu0 0.0
    %1230 = vmatprep.subr.mxu0 0.0
    %1231 = vmatpush1.msra.mxu0 0.0
    %1232 = vmatprep.subr.mxu0 0.0
    %1233 = vmatpush1.msra.mxu0 0.0
    %1234 = vmatprep.subr.mxu0 0.0
    %1235 = vmatpush1.msra.mxu0 0.0
    %1236 = vmatprep.subr.mxu0 0.0
    %1237 = vmatpush1.msra.mxu0 0.0
    %1238 = vmatprep.subr.mxu0 0.0
    %1239 = vmatpush1.msra.mxu0 0.0
    %1240 = vmatprep.subr.mxu0 0.0
    %1241 = vmatpush1.msra.mxu0 0.0
    %1242 = vmatprep.subr.mxu0 0.0
    %1243 = vmatpush1.msra.mxu0 0.0
    %1244 = vmatprep.subr.mxu0 0.0
    %1245 = vmatpush1.msra.mxu0 0.0
    %1246 = vmatprep.subr.mxu0 0.0
    %1247 = vmatpush1.msra.mxu0 0.0
    %1248 = vmatprep.subr.mxu0 0.0
    %1249 = vmatpush1.msra.mxu0 0.0
    %1250 = vmatprep.subr.mxu0 0.0
    %1251 = vmatpush1.msra.mxu0 0.0
    %1252 = vmatprep.subr.mxu0 0.0
    %1253 = vmatpush1.msra.mxu0 0.0
    %1254 = vmatprep.subr.mxu0 0.0
    %1255 = vmatpush1.msra.mxu0 0.0
    %1256 = vmatprep.subr.mxu0 0.0
    %1257 = vmatpush1.msra.mxu0 0.0
    %1258 = vmatprep.mubr.f32.mxu0 0.0
    %1259 = vmatmul.mubr.f32.gmra.mrb[0].mxu0 %v1192
    %v1260 = vpop.f32.mrb[0].mxu0
    %v1261 = vadd.f32 0.0, %v1260
    %v1262 = vpop.f32.mrb[0].mxu0
    %v1263 = vadd.f32 0.0, %v1262
    %1264 = vdwg.mxu0
    %v1266 = vsel %vm290, %v1156, 0
    %1268 = vmatprep.subr.mxu0 %v1159
    %1269 = vmatpush1.msra.mxu0 %v1158
    %1270 = vmatprep.subr.mxu0 %v1161
    %1271 = vmatpush1.msra.mxu0 %v1160
    %1272 = vmatprep.subr.mxu0 %v1163
    %1273 = vmatpush1.msra.mxu0 %v1162
    %1274 = vmatprep.subr.mxu0 %v1165
    %1275 = vmatpush1.msra.mxu0 %v1164
    %1276 = vmatprep.subr.mxu0 %v1167
    %1277 = vmatpush1.msra.mxu0 %v1166
    %1278 = vmatprep.subr.mxu0 %v1169
    %1279 = vmatpush1.msra.mxu0 %v1168
    %1280 = vmatprep.subr.mxu0 %v1171
    %1281 = vmatpush1.msra.mxu0 %v1170
    %1282 = vmatprep.subr.mxu0 %v1173
    %1283 = vmatpush1.msra.mxu0 %v1172
    %1284 = vmatprep.subr.mxu0 0.0
    %1285 = vmatpush1.msra.mxu0 0.0
    %1286 = vmatprep.subr.mxu0 0.0
    %1287 = vmatpush1.msra.mxu0 0.0
    %1288 = vmatprep.subr.mxu0 0.0
    %1289 = vmatpush1.msra.mxu0 0.0
    %1290 = vmatprep.subr.mxu0 0.0
    %1291 = vmatpush1.msra.mxu0 0.0
    %1292 = vmatprep.subr.mxu0 0.0
    %1293 = vmatpush1.msra.mxu0 0.0
    %1294 = vmatprep.subr.mxu0 0.0
    %1295 = vmatpush1.msra.mxu0 0.0
    %1296 = vmatprep.subr.mxu0 0.0
    %1297 = vmatpush1.msra.mxu0 0.0
    %1298 = vmatprep.subr.mxu0 0.0
    %1299 = vmatpush1.msra.mxu0 0.0
    %1300 = vmatprep.subr.mxu0 0.0
    %1301 = vmatpush1.msra.mxu0 0.0
    %1302 = vmatprep.subr.mxu0 0.0
    %1303 = vmatpush1.msra.mxu0 0.0
    %1304 = vmatprep.subr.mxu0 0.0
    %1305 = vmatpush1.msra.mxu0 0.0
    %1306 = vmatprep.subr.mxu0 0.0
    %1307 = vmatpush1.msra.mxu0 0.0
    %1308 = vmatprep.subr.mxu0 0.0
    %1309 = vmatpush1.msra.mxu0 0.0
    %1310 = vmatprep.subr.mxu0 0.0
    %1311 = vmatpush1.msra.mxu0 0.0
    %1312 = vmatprep.subr.mxu0 0.0
    %1313 = vmatpush1.msra.mxu0 0.0
    %1314 = vmatprep.subr.mxu0 0.0
    %1315 = vmatpush1.msra.mxu0 0.0
    %1316 = vmatprep.subr.mxu0 0.0
    %1317 = vmatpush1.msra.mxu0 0.0
    %1318 = vmatprep.subr.mxu0 0.0
    %1319 = vmatpush1.msra.mxu0 0.0
    %1320 = vmatprep.subr.mxu0 0.0
    %1321 = vmatpush1.msra.mxu0 0.0
    %1322 = vmatprep.subr.mxu0 0.0
    %1323 = vmatpush1.msra.mxu0 0.0
    %1324 = vmatprep.subr.mxu0 0.0
    %1325 = vmatpush1.msra.mxu0 0.0
    %1326 = vmatprep.subr.mxu0 0.0
    %1327 = vmatpush1.msra.mxu0 0.0
    %1328 = vmatprep.subr.mxu0 0.0
    %1329 = vmatpush1.msra.mxu0 0.0
    %1330 = vmatprep.subr.mxu0 0.0
    %1331 = vmatpush1.msra.mxu0 0.0
    %1332 = vmatprep.mubr.f32.mxu0 0.0
    %1333 = vmatmul.mubr.f32.gmra.mrb[0].mxu0 %v1266
    %v1334 = vpop.f32.mrb[0].mxu0
    %v1335 = vadd.f32 %v1261, %v1334
    %v1336 = vpop.f32.mrb[0].mxu0
    %v1337 = vadd.f32 %v1263, %v1336
    %1338 = vdwg.mxu0
    %v1339 = vld [vmem:[%s8] sm:$0x3]
    %v1341 = vlaneseq
    %v1342 = vshrl.u32 %v1341, 7
    %v1343 = vsub.s32 0, %v1342
    %v1344 = vrot.slane %v1339, %v1343
    %v1345 = vlaneseq
    %v1346 = vshrl.u32 %v1345, 7
    %v1347 = vsub.s32 1, %v1346
    %v1348 = vrot.slane %v1339, %v1347
    %v1351 = vadd.f32 %v1335, %v1344
    %v1352 = vadd.f32 %v1337, %v1348
    %v1353 = vld [vmem:[#allocation9] sm:$0xff]
    %v1354 = vld [vmem:[#allocation9 + $0x8] sm:$0xff]
    %v1355 = vld [vmem:[#allocation9 + $0x10] sm:$0xff]
    %v1356 = vld [vmem:[#allocation9 + $0x18] sm:$0xff]
    %v1357 = vld [vmem:[#allocation9 + $0x20] sm:$0xff]
    %v1358 = vld [vmem:[#allocation9 + $0x28] sm:$0xff]
    %v1359 = vld [vmem:[#allocation9 + $0x30] sm:$0xff]
    %v1360 = vld [vmem:[#allocation9 + $0x38] sm:$0xff]
    %v1361 = vld [vmem:[#allocation9 + $0x40] sm:$0xff]
    %v1362 = vld [vmem:[#allocation9 + $0x48] sm:$0xff]
    %v1363 = vld [vmem:[#allocation9 + $0x50] sm:$0xff]
    %v1364 = vld [vmem:[#allocation9 + $0x58] sm:$0xff]
    %v1365 = vld [vmem:[#allocation9 + $0x60] sm:$0xff]
    %v1366 = vld [vmem:[#allocation9 + $0x68] sm:$0xff]
    %v1367 = vld [vmem:[#allocation9 + $0x70] sm:$0xff]
    %v1368 = vld [vmem:[#allocation9 + $0x78] sm:$0xff]
    %v1369 = vld [vmem:[%s9] sm:$0x1]
    %1370 = vmatprep.subr.mxu0 %v1354
    %1371 = vmatpush1.msra.mxu0 %v1353
    %1372 = vmatprep.subr.mxu0 %v1356
    %1373 = vmatpush1.msra.mxu0 %v1355
    %1374 = vmatprep.subr.mxu0 %v1358
    %1375 = vmatpush1.msra.mxu0 %v1357
    %1376 = vmatprep.subr.mxu0 %v1360
    %1377 = vmatpush1.msra.mxu0 %v1359
    %1378 = vmatprep.subr.mxu0 %v1362
    %1379 = vmatpush1.msra.mxu0 %v1361
    %1380 = vmatprep.subr.mxu0 %v1364
    %1381 = vmatpush1.msra.mxu0 %v1363
    %1382 = vmatprep.subr.mxu0 %v1366
    %1383 = vmatpush1.msra.mxu0 %v1365
    %1384 = vmatprep.subr.mxu0 %v1368
    %1385 = vmatpush1.msra.mxu0 %v1367
    %1386 = vmatprep.subr.mxu0 0.0
    %1387 = vmatpush1.msra.mxu0 0.0
    %1388 = vmatprep.subr.mxu0 0.0
    %1389 = vmatpush1.msra.mxu0 0.0
    %1390 = vmatprep.subr.mxu0 0.0
    %1391 = vmatpush1.msra.mxu0 0.0
    %1392 = vmatprep.subr.mxu0 0.0
    %1393 = vmatpush1.msra.mxu0 0.0
    %1394 = vmatprep.subr.mxu0 0.0
    %1395 = vmatpush1.msra.mxu0 0.0
    %1396 = vmatprep.subr.mxu0 0.0
    %1397 = vmatpush1.msra.mxu0 0.0
    %1398 = vmatprep.subr.mxu0 0.0
    %1399 = vmatpush1.msra.mxu0 0.0
    %1400 = vmatprep.subr.mxu0 0.0
    %1401 = vmatpush1.msra.mxu0 0.0
    %1402 = vmatprep.subr.mxu0 0.0
    %1403 = vmatpush1.msra.mxu0 0.0
    %1404 = vmatprep.subr.mxu0 0.0
    %1405 = vmatpush1.msra.mxu0 0.0
    %1406 = vmatprep.subr.mxu0 0.0
    %1407 = vmatpush1.msra.mxu0 0.0
    %1408 = vmatprep.subr.mxu0 0.0
    %1409 = vmatpush1.msra.mxu0 0.0
    %1410 = vmatprep.subr.mxu0 0.0
    %1411 = vmatpush1.msra.mxu0 0.0
    %1412 = vmatprep.subr.mxu0 0.0
    %1413 = vmatpush1.msra.mxu0 0.0
    %1414 = vmatprep.subr.mxu0 0.0
    %1415 = vmatpush1.msra.mxu0 0.0
    %1416 = vmatprep.subr.mxu0 0.0
    %1417 = vmatpush1.msra.mxu0 0.0
    %1418 = vmatprep.subr.mxu0 0.0
    %1419 = vmatpush1.msra.mxu0 0.0
    %1420 = vmatprep.subr.mxu0 0.0
    %1421 = vmatpush1.msra.mxu0 0.0
    %1422 = vmatprep.subr.mxu0 0.0
    %1423 = vmatpush1.msra.mxu0 0.0
    %1424 = vmatprep.subr.mxu0 0.0
    %1425 = vmatpush1.msra.mxu0 0.0
    %1426 = vmatprep.subr.mxu0 0.0
    %1427 = vmatpush1.msra.mxu0 0.0
    %1428 = vmatprep.subr.mxu0 0.0
    %1429 = vmatpush1.msra.mxu0 0.0
    %1430 = vmatprep.subr.mxu0 0.0
    %1431 = vmatpush1.msra.mxu0 0.0
    %1432 = vmatprep.subr.mxu0 0.0
    %1433 = vmatpush1.msra.mxu0 0.0
    %1434 = vmatprep.mubr.f32.mxu0 0.0
    %1435 = vmatmul.mubr.f32.gmra.mrb[0].mxu0 %v292
    %v1436 = vpop.f32.mrb[0].mxu0
    %v1437 = vadd.f32 0.0, %v1436
    %v1438 = vpop.f32.mrb[0].mxu0
    %v1439 = vadd.f32 0.0, %v1438
    %1440 = vdwg.mxu0
    %v1441 = vadd.f32 %v1351, %v1437
    %v1442 = vxor.u32 %v1441, 2147483648
    %v1443 = vmul.f32 %v1442, 1.442695
    %v1444 = vpow.pop %v1443
    %v1445 = vadd.f32 %v1444, 1.0
    %v1446 = vrcp.pop %v1445
    %v1447 = vmul.f32 1.0, %v1446
    %v1448 = vadd.f32 %v1439, %v1369
    %v1449 = vmul.f32 %v1447, %v1448
    %v1450 = vadd.f32 %v1352, %v1449
    %v1451 = vtanh.pop %v1450
    %v1452 = vsub.f32 1.0, %v1447
    %1454 = vrot.lane.b32.xlu0 %v1451, 64
    %v1455 = vpop.permute.xlu0 %1454
    %v1457 = vmul.f32 %v1452, %v1455
    %v1458 = vmul.f32 %v1447, 0.0
    %v1459 = vadd.f32 %v1457, %v1458
    %1461 = vrot.lane.b32.xlu0 %v1459, 64
    %v1462 = vpop.permute.xlu0 %1461
    %v1463 = vsel %vm290, %v1462, 0
    %1465 = vmatprep.subr.mxu0 %v1354
    %1466 = vmatpush1.msra.mxu0 %v1353
    %1467 = vmatprep.subr.mxu0 %v1356
    %1468 = vmatpush1.msra.mxu0 %v1355
    %1469 = vmatprep.subr.mxu0 %v1358
    %1470 = vmatpush1.msra.mxu0 %v1357
    %1471 = vmatprep.subr.mxu0 %v1360
    %1472 = vmatpush1.msra.mxu0 %v1359
    %1473 = vmatprep.subr.mxu0 %v1362
    %1474 = vmatpush1.msra.mxu0 %v1361
    %1475 = vmatprep.subr.mxu0 %v1364
    %1476 = vmatpush1.msra.mxu0 %v1363
    %1477 = vmatprep.subr.mxu0 %v1366
    %1478 = vmatpush1.msra.mxu0 %v1365
    %1479 = vmatprep.subr.mxu0 %v1368
    %1480 = vmatpush1.msra.mxu0 %v1367
    %1481 = vmatprep.subr.mxu0 0.0
    %1482 = vmatpush1.msra.mxu0 0.0
    %1483 = vmatprep.subr.mxu0 0.0
    %1484 = vmatpush1.msra.mxu0 0.0
    %1485 = vmatprep.subr.mxu0 0.0
    %1486 = vmatpush1.msra.mxu0 0.0
    %1487 = vmatprep.subr.mxu0 0.0
    %1488 = vmatpush1.msra.mxu0 0.0
    %1489 = vmatprep.subr.mxu0 0.0
    %1490 = vmatpush1.msra.mxu0 0.0
    %1491 = vmatprep.subr.mxu0 0.0
    %1492 = vmatpush1.msra.mxu0 0.0
    %1493 = vmatprep.subr.mxu0 0.0
    %1494 = vmatpush1.msra.mxu0 0.0
    %1495 = vmatprep.subr.mxu0 0.0
    %1496 = vmatpush1.msra.mxu0 0.0
    %1497 = vmatprep.subr.mxu0 0.0
    %1498 = vmatpush1.msra.mxu0 0.0
    %1499 = vmatprep.subr.mxu0 0.0
    %1500 = vmatpush1.msra.mxu0 0.0
    %1501 = vmatprep.subr.mxu0 0.0
    %1502 = vmatpush1.msra.mxu0 0.0
    %1503 = vmatprep.subr.mxu0 0.0
    %1504 = vmatpush1.msra.mxu0 0.0
    %1505 = vmatprep.subr.mxu0 0.0
    %1506 = vmatpush1.msra.mxu0 0.0
    %1507 = vmatprep.subr.mxu0 0.0
    %1508 = vmatpush1.msra.mxu0 0.0
    %1509 = vmatprep.subr.mxu0 0.0
    %1510 = vmatpush1.msra.mxu0 0.0
    %1511 = vmatprep.subr.mxu0 0.0
    %1512 = vmatpush1.msra.mxu0 0.0
    %1513 = vmatprep.subr.mxu0 0.0
    %1514 = vmatpush1.msra.mxu0 0.0
    %1515 = vmatprep.subr.mxu0 0.0
    %1516 = vmatpush1.msra.mxu0 0.0
    %1517 = vmatprep.subr.mxu0 0.0
    %1518 = vmatpush1.msra.mxu0 0.0
    %1519 = vmatprep.subr.mxu0 0.0
    %1520 = vmatpush1.msra.mxu0 0.0
    %1521 = vmatprep.subr.mxu0 0.0
    %1522 = vmatpush1.msra.mxu0 0.0
    %1523 = vmatprep.subr.mxu0 0.0
    %1524 = vmatpush1.msra.mxu0 0.0
    %1525 = vmatprep.subr.mxu0 0.0
    %1526 = vmatpush1.msra.mxu0 0.0
    %1527 = vmatprep.subr.mxu0 0.0
    %1528 = vmatpush1.msra.mxu0 0.0
    %1529 = vmatprep.mubr.f32.mxu0 0.0
    %1530 = vmatmul.mubr.f32.gmra.mrb[0].mxu0 %v1463
    %v1531 = vpop.f32.mrb[0].mxu0
    %v1532 = vadd.f32 0.0, %v1531
    %v1533 = vpop.f32.mrb[0].mxu0
    %v1534 = vadd.f32 0.0, %v1533
    %1535 = vdwg.mxu0
    %v1537 = vrot.slane %v1532, 7
    %v1539 = vadd.f32 %v1351, %v1537
    %v1540 = vxor.u32 %v1539, 2147483648
    %v1541 = vmul.f32 %v1540, 1.442695
    %v1542 = vpow.pop %v1541
    %v1543 = vadd.f32 %v1542, 1.0
    %v1544 = vrcp.pop %v1543
    %v1545 = vmul.f32 1.0, %v1544
    %v1546 = vadd.f32 %v1534, %v1369
    %v1548 = vrot.slane %v1546, 7
    %v1550 = vmul.f32 %v1545, %v1548
    %v1551 = vadd.f32 %v1352, %v1550
    %v1552 = vtanh.pop %v1551
    %v1553 = vsub.f32 1.0, %v1545
    %1555 = vrot.lane.b32.xlu0 %v1552, 64
    %v1556 = vpop.permute.xlu0 %1555
    %v1558 = vmul.f32 %v1553, %v1556
    %v1559 = vrot.slane %v1459, 7
    %v1561 = vmul.f32 %v1545, %v1559
    %v1562 = vadd.f32 %v1558, %v1561
    %v1564 = vrot.slane %v1562, 1
    %1565 = vrot.lane.b32.xlu0 %v1564, 64
    %v1566 = vpop.permute.xlu0 %1565
    %v1567 = vsel %vm290, %v1566, 0
    %1569 = vmatprep.subr.mxu0 %v1354
    %1570 = vmatpush1.msra.mxu0 %v1353
    %1571 = vmatprep.subr.mxu0 %v1356
    %1572 = vmatpush1.msra.mxu0 %v1355
    %1573 = vmatprep.subr.mxu0 %v1358
    %1574 = vmatpush1.msra.mxu0 %v1357
    %1575 = vmatprep.subr.mxu0 %v1360
    %1576 = vmatpush1.msra.mxu0 %v1359
    %1577 = vmatprep.subr.mxu0 %v1362
    %1578 = vmatpush1.msra.mxu0 %v1361
    %1579 = vmatprep.subr.mxu0 %v1364
    %1580 = vmatpush1.msra.mxu0 %v1363
    %1581 = vmatprep.subr.mxu0 %v1366
    %1582 = vmatpush1.msra.mxu0 %v1365
    %1583 = vmatprep.subr.mxu0 %v1368
    %1584 = vmatpush1.msra.mxu0 %v1367
    %1585 = vmatprep.subr.mxu0 0.0
    %1586 = vmatpush1.msra.mxu0 0.0
    %1587 = vmatprep.subr.mxu0 0.0
    %1588 = vmatpush1.msra.mxu0 0.0
    %1589 = vmatprep.subr.mxu0 0.0
    %1590 = vmatpush1.msra.mxu0 0.0
    %1591 = vmatprep.subr.mxu0 0.0
    %1592 = vmatpush1.msra.mxu0 0.0
    %1593 = vmatprep.subr.mxu0 0.0
    %1594 = vmatpush1.msra.mxu0 0.0
    %1595 = vmatprep.subr.mxu0 0.0
    %1596 = vmatpush1.msra.mxu0 0.0
    %1597 = vmatprep.subr.mxu0 0.0
    %1598 = vmatpush1.msra.mxu0 0.0
    %1599 = vmatprep.subr.mxu0 0.0
    %1600 = vmatpush1.msra.mxu0 0.0
    %1601 = vmatprep.subr.mxu0 0.0
    %1602 = vmatpush1.msra.mxu0 0.0
    %1603 = vmatprep.subr.mxu0 0.0
    %1604 = vmatpush1.msra.mxu0 0.0
    %1605 = vmatprep.subr.mxu0 0.0
    %1606 = vmatpush1.msra.mxu0 0.0
    %1607 = vmatprep.subr.mxu0 0.0
    %1608 = vmatpush1.msra.mxu0 0.0
    %1609 = vmatprep.subr.mxu0 0.0
    %1610 = vmatpush1.msra.mxu0 0.0
    %1611 = vmatprep.subr.mxu0 0.0
    %1612 = vmatpush1.msra.mxu0 0.0
    %1613 = vmatprep.subr.mxu0 0.0
    %1614 = vmatpush1.msra.mxu0 0.0
    %1615 = vmatprep.subr.mxu0 0.0
    %1616 = vmatpush1.msra.mxu0 0.0
    %1617 = vmatprep.subr.mxu0 0.0
    %1618 = vmatpush1.msra.mxu0 0.0
    %1619 = vmatprep.subr.mxu0 0.0
    %1620 = vmatpush1.msra.mxu0 0.0
    %1621 = vmatprep.subr.mxu0 0.0
    %1622 = vmatpush1.msra.mxu0 0.0
    %1623 = vmatprep.subr.mxu0 0.0
    %1624 = vmatpush1.msra.mxu0 0.0
    %1625 = vmatprep.subr.mxu0 0.0
    %1626 = vmatpush1.msra.mxu0 0.0
    %1627 = vmatprep.subr.mxu0 0.0
    %1628 = vmatpush1.msra.mxu0 0.0
    %1629 = vmatprep.subr.mxu0 0.0
    %1630 = vmatpush1.msra.mxu0 0.0
    %1631 = vmatprep.subr.mxu0 0.0
    %1632 = vmatpush1.msra.mxu0 0.0
    %1633 = vmatprep.mubr.f32.mxu0 0.0
    %1634 = vmatmul.mubr.f32.gmra.mrb[0].mxu0 %v1567
    %v1635 = vpop.f32.mrb[0].mxu0
    %v1636 = vadd.f32 0.0, %v1635
    %v1637 = vpop.f32.mrb[0].mxu0
    %v1638 = vadd.f32 0.0, %v1637
    %1639 = vdwg.mxu0
    %v1641 = vrot.slane %v1636, 6
    %v1643 = vadd.f32 %v1351, %v1641
    %v1644 = vxor.u32 %v1643, 2147483648
    %v1645 = vmul.f32 %v1644, 1.442695
    %v1646 = vpow.pop %v1645
    %v1647 = vadd.f32 %v1646, 1.0
    %v1648 = vrcp.pop %v1647
    %v1649 = vmul.f32 1.0, %v1648
    %v1650 = vadd.f32 %v1638, %v1369
    %v1652 = vrot.slane %v1650, 6
    %v1654 = vmul.f32 %v1649, %v1652
    %v1655 = vadd.f32 %v1352, %v1654
    %v1656 = vtanh.pop %v1655
    %v1657 = vsub.f32 1.0, %v1649
    %1659 = vrot.lane.b32.xlu0 %v1656, 64
    %v1660 = vpop.permute.xlu0 %1659
    %v1662 = vmul.f32 %v1657, %v1660
    %v1663 = vrot.slane %v1562, 7
    %v1665 = vmul.f32 %v1649, %v1663
    %v1666 = vadd.f32 %v1662, %v1665
    %v1668 = vrot.slane %v1666, 2
    %1669 = vrot.lane.b32.xlu0 %v1668, 64
    %v1670 = vpop.permute.xlu0 %1669
    %v1671 = vsel %vm290, %v1670, 0
    %1673 = vmatprep.subr.mxu0 %v1354
    %1674 = vmatpush1.msra.mxu0 %v1353
    %1675 = vmatprep.subr.mxu0 %v1356
    %1676 = vmatpush1.msra.mxu0 %v1355
    %1677 = vmatprep.subr.mxu0 %v1358
    %1678 = vmatpush1.msra.mxu0 %v1357
    %1679 = vmatprep.subr.mxu0 %v1360
    %1680 = vmatpush1.msra.mxu0 %v1359
    %1681 = vmatprep.subr.mxu0 %v1362
    %1682 = vmatpush1.msra.mxu0 %v1361
    %1683 = vmatprep.subr.mxu0 %v1364
    %1684 = vmatpush1.msra.mxu0 %v1363
    %1685 = vmatprep.subr.mxu0 %v1366
    %1686 = vmatpush1.msra.mxu0 %v1365
    %1687 = vmatprep.subr.mxu0 %v1368
    %1688 = vmatpush1.msra.mxu0 %v1367
    %1689 = vmatprep.subr.mxu0 0.0
    %1690 = vmatpush1.msra.mxu0 0.0
    %1691 = vmatprep.subr.mxu0 0.0
    %1692 = vmatpush1.msra.mxu0 0.0
    %1693 = vmatprep.subr.mxu0 0.0
    %1694 = vmatpush1.msra.mxu0 0.0
    %1695 = vmatprep.subr.mxu0 0.0
    %1696 = vmatpush1.msra.mxu0 0.0
    %1697 = vmatprep.subr.mxu0 0.0
    %1698 = vmatpush1.msra.mxu0 0.0
    %1699 = vmatprep.subr.mxu0 0.0
    %1700 = vmatpush1.msra.mxu0 0.0
    %1701 = vmatprep.subr.mxu0 0.0
    %1702 = vmatpush1.msra.mxu0 0.0
    %1703 = vmatprep.subr.mxu0 0.0
    %1704 = vmatpush1.msra.mxu0 0.0
    %1705 = vmatprep.subr.mxu0 0.0
    %1706 = vmatpush1.msra.mxu0 0.0
    %1707 = vmatprep.subr.mxu0 0.0
    %1708 = vmatpush1.msra.mxu0 0.0
    %1709 = vmatprep.subr.mxu0 0.0
    %1710 = vmatpush1.msra.mxu0 0.0
    %1711 = vmatprep.subr.mxu0 0.0
    %1712 = vmatpush1.msra.mxu0 0.0
    %1713 = vmatprep.subr.mxu0 0.0
    %1714 = vmatpush1.msra.mxu0 0.0
    %1715 = vmatprep.subr.mxu0 0.0
    %1716 = vmatpush1.msra.mxu0 0.0
    %1717 = vmatprep.subr.mxu0 0.0
    %1718 = vmatpush1.msra.mxu0 0.0
    %1719 = vmatprep.subr.mxu0 0.0
    %1720 = vmatpush1.msra.mxu0 0.0
    %1721 = vmatprep.subr.mxu0 0.0
    %1722 = vmatpush1.msra.mxu0 0.0
    %1723 = vmatprep.subr.mxu0 0.0
    %1724 = vmatpush1.msra.mxu0 0.0
    %1725 = vmatprep.subr.mxu0 0.0
    %1726 = vmatpush1.msra.mxu0 0.0
    %1727 = vmatprep.subr.mxu0 0.0
    %1728 = vmatpush1.msra.mxu0 0.0
    %1729 = vmatprep.subr.mxu0 0.0
    %1730 = vmatpush1.msra.mxu0 0.0
    %1731 = vmatprep.subr.mxu0 0.0
    %1732 = vmatpush1.msra.mxu0 0.0
    %1733 = vmatprep.subr.mxu0 0.0
    %1734 = vmatpush1.msra.mxu0 0.0
    %1735 = vmatprep.subr.mxu0 0.0
    %1736 = vmatpush1.msra.mxu0 0.0
    %1737 = vmatprep.mubr.f32.mxu0 0.0
    %1738 = vmatmul.mubr.f32.gmra.mrb[0].mxu0 %v1671
    %v1739 = vpop.f32.mrb[0].mxu0
    %v1740 = vadd.f32 0.0, %v1739
    %v1741 = vpop.f32.mrb[0].mxu0
    %v1742 = vadd.f32 0.0, %v1741
    %1743 = vdwg.mxu0
    %v1745 = vrot.slane %v1740, 5
    %v1747 = vadd.f32 %v1351, %v1745
    %v1748 = vxor.u32 %v1747, 2147483648
    %v1749 = vmul.f32 %v1748, 1.442695
    %v1750 = vpow.pop %v1749
    %v1751 = vadd.f32 %v1750, 1.0
    %v1752 = vrcp.pop %v1751
    %v1753 = vmul.f32 1.0, %v1752
    %v1754 = vadd.f32 %v1742, %v1369
    %v1756 = vrot.slane %v1754, 5
    %v1758 = vmul.f32 %v1753, %v1756
    %v1759 = vadd.f32 %v1352, %v1758
    %v1760 = vtanh.pop %v1759
    %v1761 = vsub.f32 1.0, %v1753
    %1763 = vrot.lane.b32.xlu0 %v1760, 64
    %v1764 = vpop.permute.xlu0 %1763
    %v1766 = vmul.f32 %v1761, %v1764
    %v1767 = vrot.slane %v1666, 7
    %v1769 = vmul.f32 %v1753, %v1767
    %v1770 = vadd.f32 %v1766, %v1769
    %v1772 = vrot.slane %v1770, 3
    %1773 = vrot.lane.b32.xlu0 %v1772, 64
    %v1774 = vpop.permute.xlu0 %1773
    %v1775 = vsel %vm290, %v1774, 0
    %1777 = vmatprep.subr.mxu0 %v1354
    %1778 = vmatpush1.msra.mxu0 %v1353
    %1779 = vmatprep.subr.mxu0 %v1356
    %1780 = vmatpush1.msra.mxu0 %v1355
    %1781 = vmatprep.subr.mxu0 %v1358
    %1782 = vmatpush1.msra.mxu0 %v1357
    %1783 = vmatprep.subr.mxu0 %v1360
    %1784 = vmatpush1.msra.mxu0 %v1359
    %1785 = vmatprep.subr.mxu0 %v1362
    %1786 = vmatpush1.msra.mxu0 %v1361
    %1787 = vmatprep.subr.mxu0 %v1364
    %1788 = vmatpush1.msra.mxu0 %v1363
    %1789 = vmatprep.subr.mxu0 %v1366
    %1790 = vmatpush1.msra.mxu0 %v1365
    %1791 = vmatprep.subr.mxu0 %v1368
    %1792 = vmatpush1.msra.mxu0 %v1367
    %1793 = vmatprep.subr.mxu0 0.0
    %1794 = vmatpush1.msra.mxu0 0.0
    %1795 = vmatprep.subr.mxu0 0.0
    %1796 = vmatpush1.msra.mxu0 0.0
    %1797 = vmatprep.subr.mxu0 0.0
    %1798 = vmatpush1.msra.mxu0 0.0
    %1799 = vmatprep.subr.mxu0 0.0
    %1800 = vmatpush1.msra.mxu0 0.0
    %1801 = vmatprep.subr.mxu0 0.0
    %1802 = vmatpush1.msra.mxu0 0.0
    %1803 = vmatprep.subr.mxu0 0.0
    %1804 = vmatpush1.msra.mxu0 0.0
    %1805 = vmatprep.subr.mxu0 0.0
    %1806 = vmatpush1.msra.mxu0 0.0
    %1807 = vmatprep.subr.mxu0 0.0
    %1808 = vmatpush1.msra.mxu0 0.0
    %1809 = vmatprep.subr.mxu0 0.0
    %1810 = vmatpush1.msra.mxu0 0.0
    %1811 = vmatprep.subr.mxu0 0.0
    %1812 = vmatpush1.msra.mxu0 0.0
    %1813 = vmatprep.subr.mxu0 0.0
    %1814 = vmatpush1.msra.mxu0 0.0
    %1815 = vmatprep.subr.mxu0 0.0
    %1816 = vmatpush1.msra.mxu0 0.0
    %1817 = vmatprep.subr.mxu0 0.0
    %1818 = vmatpush1.msra.mxu0 0.0
    %1819 = vmatprep.subr.mxu0 0.0
    %1820 = vmatpush1.msra.mxu0 0.0
    %1821 = vmatprep.subr.mxu0 0.0
    %1822 = vmatpush1.msra.mxu0 0.0
    %1823 = vmatprep.subr.mxu0 0.0
    %1824 = vmatpush1.msra.mxu0 0.0
    %1825 = vmatprep.subr.mxu0 0.0
    %1826 = vmatpush1.msra.mxu0 0.0
    %1827 = vmatprep.subr.mxu0 0.0
    %1828 = vmatpush1.msra.mxu0 0.0
    %1829 = vmatprep.subr.mxu0 0.0
    %1830 = vmatpush1.msra.mxu0 0.0
    %1831 = vmatprep.subr.mxu0 0.0
    %1832 = vmatpush1.msra.mxu0 0.0
    %1833 = vmatprep.subr.mxu0 0.0
    %1834 = vmatpush1.msra.mxu0 0.0
    %1835 = vmatprep.subr.mxu0 0.0
    %1836 = vmatpush1.msra.mxu0 0.0
    %1837 = vmatprep.subr.mxu0 0.0
    %1838 = vmatpush1.msra.mxu0 0.0
    %1839 = vmatprep.subr.mxu0 0.0
    %1840 = vmatpush1.msra.mxu0 0.0
    %1841 = vmatprep.mubr.f32.mxu0 0.0
    %1842 = vmatmul.mubr.f32.gmra.mrb[0].mxu0 %v1775
    %v1843 = vpop.f32.mrb[0].mxu0
    %v1844 = vadd.f32 0.0, %v1843
    %v1845 = vpop.f32.mrb[0].mxu0
    %v1846 = vadd.f32 0.0, %v1845
    %1847 = vdwg.mxu0
    %v1849 = vrot.slane %v1844, 4
    %v1851 = vadd.f32 %v1351, %v1849
    %v1852 = vxor.u32 %v1851, 2147483648
    %v1853 = vmul.f32 %v1852, 1.442695
    %v1854 = vpow.pop %v1853
    %v1855 = vadd.f32 %v1854, 1.0
    %v1856 = vrcp.pop %v1855
    %v1857 = vmul.f32 1.0, %v1856
    %v1858 = vadd.f32 %v1846, %v1369
    %v1860 = vrot.slane %v1858, 4
    %v1862 = vmul.f32 %v1857, %v1860
    %v1863 = vadd.f32 %v1352, %v1862
    %v1864 = vtanh.pop %v1863
    %v1865 = vsub.f32 1.0, %v1857
    %1867 = vrot.lane.b32.xlu0 %v1864, 64
    %v1868 = vpop.permute.xlu0 %1867
    %v1870 = vmul.f32 %v1865, %v1868
    %v1871 = vrot.slane %v1770, 7
    %v1873 = vmul.f32 %v1857, %v1871
    %v1874 = vadd.f32 %v1870, %v1873
    %v1876 = vrot.slane %v1874, 4
    %1877 = vrot.lane.b32.xlu0 %v1876, 64
    %v1878 = vpop.permute.xlu0 %1877
    %v1879 = vsel %vm290, %v1878, 0
    %1881 = vmatprep.subr.mxu0 %v1354
    %1882 = vmatpush1.msra.mxu0 %v1353
    %1883 = vmatprep.subr.mxu0 %v1356
    %1884 = vmatpush1.msra.mxu0 %v1355
    %1885 = vmatprep.subr.mxu0 %v1358
    %1886 = vmatpush1.msra.mxu0 %v1357
    %1887 = vmatprep.subr.mxu0 %v1360
    %1888 = vmatpush1.msra.mxu0 %v1359
    %1889 = vmatprep.subr.mxu0 %v1362
    %1890 = vmatpush1.msra.mxu0 %v1361
    %1891 = vmatprep.subr.mxu0 %v1364
    %1892 = vmatpush1.msra.mxu0 %v1363
    %1893 = vmatprep.subr.mxu0 %v1366
    %1894 = vmatpush1.msra.mxu0 %v1365
    %1895 = vmatprep.subr.mxu0 %v1368
    %1896 = vmatpush1.msra.mxu0 %v1367
    %1897 = vmatprep.subr.mxu0 0.0
    %1898 = vmatpush1.msra.mxu0 0.0
    %1899 = vmatprep.subr.mxu0 0.0
    %1900 = vmatpush1.msra.mxu0 0.0
    %1901 = vmatprep.subr.mxu0 0.0
    %1902 = vmatpush1.msra.mxu0 0.0
    %1903 = vmatprep.subr.mxu0 0.0
    %1904 = vmatpush1.msra.mxu0 0.0
    %1905 = vmatprep.subr.mxu0 0.0
    %1906 = vmatpush1.msra.mxu0 0.0
    %1907 = vmatprep.subr.mxu0 0.0
    %1908 = vmatpush1.msra.mxu0 0.0
    %1909 = vmatprep.subr.mxu0 0.0
    %1910 = vmatpush1.msra.mxu0 0.0
    %1911 = vmatprep.subr.mxu0 0.0
    %1912 = vmatpush1.msra.mxu0 0.0
    %1913 = vmatprep.subr.mxu0 0.0
    %1914 = vmatpush1.msra.mxu0 0.0
    %1915 = vmatprep.subr.mxu0 0.0
    %1916 = vmatpush1.msra.mxu0 0.0
    %1917 = vmatprep.subr.mxu0 0.0
    %1918 = vmatpush1.msra.mxu0 0.0
    %1919 = vmatprep.subr.mxu0 0.0
    %1920 = vmatpush1.msra.mxu0 0.0
    %1921 = vmatprep.subr.mxu0 0.0
    %1922 = vmatpush1.msra.mxu0 0.0
    %1923 = vmatprep.subr.mxu0 0.0
    %1924 = vmatpush1.msra.mxu0 0.0
    %1925 = vmatprep.subr.mxu0 0.0
    %1926 = vmatpush1.msra.mxu0 0.0
    %1927 = vmatprep.subr.mxu0 0.0
    %1928 = vmatpush1.msra.mxu0 0.0
    %1929 = vmatprep.subr.mxu0 0.0
    %1930 = vmatpush1.msra.mxu0 0.0
    %1931 = vmatprep.subr.mxu0 0.0
    %1932 = vmatpush1.msra.mxu0 0.0
    %1933 = vmatprep.subr.mxu0 0.0
    %1934 = vmatpush1.msra.mxu0 0.0
    %1935 = vmatprep.subr.mxu0 0.0
    %1936 = vmatpush1.msra.mxu0 0.0
    %1937 = vmatprep.subr.mxu0 0.0
    %1938 = vmatpush1.msra.mxu0 0.0
    %1939 = vmatprep.subr.mxu0 0.0
    %1940 = vmatpush1.msra.mxu0 0.0
    %1941 = vmatprep.subr.mxu0 0.0
    %1942 = vmatpush1.msra.mxu0 0.0
    %1943 = vmatprep.subr.mxu0 0.0
    %1944 = vmatpush1.msra.mxu0 0.0
    %1945 = vmatprep.mubr.f32.mxu0 0.0
    %1946 = vmatmul.mubr.f32.gmra.mrb[0].mxu0 %v1879
    %v1947 = vpop.f32.mrb[0].mxu0
    %v1948 = vadd.f32 0.0, %v1947
    %v1949 = vpop.f32.mrb[0].mxu0
    %v1950 = vadd.f32 0.0, %v1949
    %1951 = vdwg.mxu0
    %v1953 = vrot.slane %v1948, 3
    %v1955 = vadd.f32 %v1351, %v1953
    %v1956 = vxor.u32 %v1955, 2147483648
    %v1957 = vmul.f32 %v1956, 1.442695
    %v1958 = vpow.pop %v1957
    %v1959 = vadd.f32 %v1958, 1.0
    %v1960 = vrcp.pop %v1959
    %v1961 = vmul.f32 1.0, %v1960
    %v1962 = vadd.f32 %v1950, %v1369
    %v1964 = vrot.slane %v1962, 3
    %v1966 = vmul.f32 %v1961, %v1964
    %v1967 = vadd.f32 %v1352, %v1966
    %v1968 = vtanh.pop %v1967
    %v1969 = vsub.f32 1.0, %v1961
    %1971 = vrot.lane.b32.xlu0 %v1968, 64
    %v1972 = vpop.permute.xlu0 %1971
    %v1974 = vmul.f32 %v1969, %v1972
    %v1975 = vrot.slane %v1874, 7
    %v1977 = vmul.f32 %v1961, %v1975
    %v1978 = vadd.f32 %v1974, %v1977
    %v1980 = vrot.slane %v1978, 5
    %1981 = vrot.lane.b32.xlu0 %v1980, 64
    %v1982 = vpop.permute.xlu0 %1981
    %v1983 = vsel %vm290, %v1982, 0
    %1985 = vmatprep.subr.mxu0 %v1354
    %1986 = vmatpush1.msra.mxu0 %v1353
    %1987 = vmatprep.subr.mxu0 %v1356
    %1988 = vmatpush1.msra.mxu0 %v1355
    %1989 = vmatprep.subr.mxu0 %v1358
    %1990 = vmatpush1.msra.mxu0 %v1357
    %1991 = vmatprep.subr.mxu0 %v1360
    %1992 = vmatpush1.msra.mxu0 %v1359
    %1993 = vmatprep.subr.mxu0 %v1362
    %1994 = vmatpush1.msra.mxu0 %v1361
    %1995 = vmatprep.subr.mxu0 %v1364
    %1996 = vmatpush1.msra.mxu0 %v1363
    %1997 = vmatprep.subr.mxu0 %v1366
    %1998 = vmatpush1.msra.mxu0 %v1365
    %1999 = vmatprep.subr.mxu0 %v1368
    %2000 = vmatpush1.msra.mxu0 %v1367
    %2001 = vmatprep.subr.mxu0 0.0
    %2002 = vmatpush1.msra.mxu0 0.0
    %2003 = vmatprep.subr.mxu0 0.0
    %2004 = vmatpush1.msra.mxu0 0.0
    %2005 = vmatprep.subr.mxu0 0.0
    %2006 = vmatpush1.msra.mxu0 0.0
    %2007 = vmatprep.subr.mxu0 0.0
    %2008 = vmatpush1.msra.mxu0 0.0
    %2009 = vmatprep.subr.mxu0 0.0
    %2010 = vmatpush1.msra.mxu0 0.0
    %2011 = vmatprep.subr.mxu0 0.0
    %2012 = vmatpush1.msra.mxu0 0.0
    %2013 = vmatprep.subr.mxu0 0.0
    %2014 = vmatpush1.msra.mxu0 0.0
    %2015 = vmatprep.subr.mxu0 0.0
    %2016 = vmatpush1.msra.mxu0 0.0
    %2017 = vmatprep.subr.mxu0 0.0
    %2018 = vmatpush1.msra.mxu0 0.0
    %2019 = vmatprep.subr.mxu0 0.0
    %2020 = vmatpush1.msra.mxu0 0.0
    %2021 = vmatprep.subr.mxu0 0.0
    %2022 = vmatpush1.msra.mxu0 0.0
    %2023 = vmatprep.subr.mxu0 0.0
    %2024 = vmatpush1.msra.mxu0 0.0
    %2025 = vmatprep.subr.mxu0 0.0
    %2026 = vmatpush1.msra.mxu0 0.0
    %2027 = vmatprep.subr.mxu0 0.0
    %2028 = vmatpush1.msra.mxu0 0.0
    %2029 = vmatprep.subr.mxu0 0.0
    %2030 = vmatpush1.msra.mxu0 0.0
    %2031 = vmatprep.subr.mxu0 0.0
    %2032 = vmatpush1.msra.mxu0 0.0
    %2033 = vmatprep.subr.mxu0 0.0
    %2034 = vmatpush1.msra.mxu0 0.0
    %2035 = vmatprep.subr.mxu0 0.0
    %2036 = vmatpush1.msra.mxu0 0.0
    %2037 = vmatprep.subr.mxu0 0.0
    %2038 = vmatpush1.msra.mxu0 0.0
    %2039 = vmatprep.subr.mxu0 0.0
    %2040 = vmatpush1.msra.mxu0 0.0
    %2041 = vmatprep.subr.mxu0 0.0
    %2042 = vmatpush1.msra.mxu0 0.0
    %2043 = vmatprep.subr.mxu0 0.0
    %2044 = vmatpush1.msra.mxu0 0.0
    %2045 = vmatprep.subr.mxu0 0.0
    %2046 = vmatpush1.msra.mxu0 0.0
    %2047 = vmatprep.subr.mxu0 0.0
    %2048 = vmatpush1.msra.mxu0 0.0
    %2049 = vmatprep.mubr.f32.mxu0 0.0
    %2050 = vmatmul.mubr.f32.gmra.mrb[0].mxu0 %v1983
    %v2051 = vpop.f32.mrb[0].mxu0
    %v2052 = vadd.f32 0.0, %v2051
    %v2053 = vpop.f32.mrb[0].mxu0
    %v2054 = vadd.f32 0.0, %v2053
    %2055 = vdwg.mxu0
    %v2057 = vrot.slane %v2052, 2
    %v2059 = vadd.f32 %v1351, %v2057
    %v2060 = vxor.u32 %v2059, 2147483648
    %v2061 = vmul.f32 %v2060, 1.442695
    %v2062 = vpow.pop %v2061
    %v2063 = vadd.f32 %v2062, 1.0
    %v2064 = vrcp.pop %v2063
    %v2065 = vmul.f32 1.0, %v2064
    %v2066 = vadd.f32 %v2054, %v1369
    %v2068 = vrot.slane %v2066, 2
    %v2070 = vmul.f32 %v2065, %v2068
    %v2071 = vadd.f32 %v1352, %v2070
    %v2072 = vtanh.pop %v2071
    %v2073 = vsub.f32 1.0, %v2065
    %2075 = vrot.lane.b32.xlu0 %v2072, 64
    %v2076 = vpop.permute.xlu0 %2075
    %v2078 = vmul.f32 %v2073, %v2076
    %v2079 = vrot.slane %v1978, 7
    %v2081 = vmul.f32 %v2065, %v2079
    %v2082 = vadd.f32 %v2078, %v2081
    %v2084 = vrot.slane %v2082, 6
    %2085 = vrot.lane.b32.xlu0 %v2084, 64
    %v2086 = vpop.permute.xlu0 %2085
    %v2087 = vsel %vm290, %v2086, 0
    %2089 = vmatprep.subr.mxu0 %v1354
    %2090 = vmatpush1.msra.mxu0 %v1353
    %2091 = vmatprep.subr.mxu0 %v1356
    %2092 = vmatpush1.msra.mxu0 %v1355
    %2093 = vmatprep.subr.mxu0 %v1358
    %2094 = vmatpush1.msra.mxu0 %v1357
    %2095 = vmatprep.subr.mxu0 %v1360
    %2096 = vmatpush1.msra.mxu0 %v1359
    %2097 = vmatprep.subr.mxu0 %v1362
    %2098 = vmatpush1.msra.mxu0 %v1361
    %2099 = vmatprep.subr.mxu0 %v1364
    %2100 = vmatpush1.msra.mxu0 %v1363
    %2101 = vmatprep.subr.mxu0 %v1366
    %2102 = vmatpush1.msra.mxu0 %v1365
    %2103 = vmatprep.subr.mxu0 %v1368
    %2104 = vmatpush1.msra.mxu0 %v1367
    %2105 = vmatprep.subr.mxu0 0.0
    %2106 = vmatpush1.msra.mxu0 0.0
    %2107 = vmatprep.subr.mxu0 0.0
    %2108 = vmatpush1.msra.mxu0 0.0
    %2109 = vmatprep.subr.mxu0 0.0
    %2110 = vmatpush1.msra.mxu0 0.0
    %2111 = vmatprep.subr.mxu0 0.0
    %2112 = vmatpush1.msra.mxu0 0.0
    %2113 = vmatprep.subr.mxu0 0.0
    %2114 = vmatpush1.msra.mxu0 0.0
    %2115 = vmatprep.subr.mxu0 0.0
    %2116 = vmatpush1.msra.mxu0 0.0
    %2117 = vmatprep.subr.mxu0 0.0
    %2118 = vmatpush1.msra.mxu0 0.0
    %2119 = vmatprep.subr.mxu0 0.0
    %2120 = vmatpush1.msra.mxu0 0.0
    %2121 = vmatprep.subr.mxu0 0.0
    %2122 = vmatpush1.msra.mxu0 0.0
    %2123 = vmatprep.subr.mxu0 0.0
    %2124 = vmatpush1.msra.mxu0 0.0
    %2125 = vmatprep.subr.mxu0 0.0
    %2126 = vmatpush1.msra.mxu0 0.0
    %2127 = vmatprep.subr.mxu0 0.0
    %2128 = vmatpush1.msra.mxu0 0.0
    %2129 = vmatprep.subr.mxu0 0.0
    %2130 = vmatpush1.msra.mxu0 0.0
    %2131 = vmatprep.subr.mxu0 0.0
    %2132 = vmatpush1.msra.mxu0 0.0
    %2133 = vmatprep.subr.mxu0 0.0
    %2134 = vmatpush1.msra.mxu0 0.0
    %2135 = vmatprep.subr.mxu0 0.0
    %2136 = vmatpush1.msra.mxu0 0.0
    %2137 = vmatprep.subr.mxu0 0.0
    %2138 = vmatpush1.msra.mxu0 0.0
    %2139 = vmatprep.subr.mxu0 0.0
    %2140 = vmatpush1.msra.mxu0 0.0
    %2141 = vmatprep.subr.mxu0 0.0
    %2142 = vmatpush1.msra.mxu0 0.0
    %2143 = vmatprep.subr.mxu0 0.0
    %2144 = vmatpush1.msra.mxu0 0.0
    %2145 = vmatprep.subr.mxu0 0.0
    %2146 = vmatpush1.msra.mxu0 0.0
    %2147 = vmatprep.subr.mxu0 0.0
    %2148 = vmatpush1.msra.mxu0 0.0
    %2149 = vmatprep.subr.mxu0 0.0
    %2150 = vmatpush1.msra.mxu0 0.0
    %2151 = vmatprep.subr.mxu0 0.0
    %2152 = vmatpush1.msra.mxu0 0.0
    %2153 = vmatprep.mubr.f32.mxu0 0.0
    %2154 = vmatmul.mubr.f32.gmra.mrb[0].mxu0 %v2087
    %v2155 = vpop.f32.mrb[0].mxu0
    %v2156 = vadd.f32 0.0, %v2155
    %v2157 = vpop.f32.mrb[0].mxu0
    %v2158 = vadd.f32 0.0, %v2157
    %2159 = vdwg.mxu0
    %v2161 = vrot.slane %v2156, 1
    %v2163 = vadd.f32 %v1351, %v2161
    %v2164 = vxor.u32 %v2163, 2147483648
    %v2165 = vmul.f32 %v2164, 1.442695
    %v2166 = vpow.pop %v2165
    %v2167 = vadd.f32 %v2166, 1.0
    %v2168 = vrcp.pop %v2167
    %v2169 = vmul.f32 1.0, %v2168
    %v2170 = vadd.f32 %v2158, %v1369
    %v2172 = vrot.slane %v2170, 1
    %v2174 = vmul.f32 %v2169, %v2172
    %v2175 = vadd.f32 %v1352, %v2174
    %v2176 = vtanh.pop %v2175
    %v2177 = vsub.f32 1.0, %v2169
    %2179 = vrot.lane.b32.xlu0 %v2176, 64
    %v2180 = vpop.permute.xlu0 %2179
    %v2182 = vmul.f32 %v2177, %v2180
    %v2183 = vrot.slane %v2082, 7
    %v2185 = vmul.f32 %v2169, %v2183
    %v2186 = vadd.f32 %v2182, %v2185
    %v2187 = vsel %vm1111, %v1459, %v1562
    %v2188 = vsel %vm1113, %v2187, %v1666
    %v2189 = vsel %vm1115, %v2188, %v1770
    %v2190 = vsel %vm1117, %v2189, %v1874
    %v2191 = vsel %vm1119, %v2190, %v1978
    %v2192 = vsel %vm1121, %v2191, %v2082
    %v2193 = vsel %vm1123, %v2192, %v2186
    %v2195 = vrot.slane %v2186, 7
    %v2197 = vrot.slane %v2082, 5
    %v2199 = vrot.slane %v1978, 3
    %v2201 = vrot.slane %v1874, 1
    %v2203 = vrot.slane %v1666, 5
    %v2205 = vrot.slane %v1562, 3
    %v2207 = vrot.slane %v1459, 1
    %v2209 = vsel %vm1111, %v2195, %v2197
    %v2210 = vsel %vm1113, %v2209, %v2199
    %v2211 = vsel %vm1115, %v2210, %v2201
    %v2212 = vsel %vm1117, %v2211, %v1871
    %v2213 = vsel %vm1119, %v2212, %v2203
    %v2214 = vsel %vm1121, %v2213, %v2205
    %v2215 = vsel %vm1123, %v2214, %v2207
    %2217 = vrot.lane.b32.xlu0 %v2215, 96
    %v2218 = vpop.permute.xlu0 %2217
    %v2220 = vadd.f32 %v2193, %v2218
    %v2221 = vld [vmem:[%s10] sm:$0x1]
    %v2222 = vld [vmem:[#allocation2] sm:$0x1]
    %2224 = vset.pattern.permute.xlu0 0
    %2225 = vperm.xlu0 %2224, %v2222
    %v2226 = vpop.permute.xlu0 %2225
    %v2228 = vlaneseq
    %v2229 = vshrl.u32 %v2228, 7
    %v2230 = vsub.s32 0, %v2229
    %v2231 = vrot.slane %v2226, %v2230
    %2233 = vrot.lane.b32.xlu0 %v2220, 64
    %v2234 = vpop.permute.xlu0 %2233
    %v2236 = vsel %vm1155, %v2221, 0
    %v2238 = vsel %vm1155, %v2234, 0
    %2240 = vmatprep.subr.mxu0 0.0
    %2241 = vmatpush1.xpose.msra.mxu0 %v2238
    %2242 = vmatprep.subr.mxu0 0.0
    %2243 = vmatpush1.xpose.msra.mxu0 0.0
    %2244 = vmatprep.subr.mxu0 0.0
    %2245 = vmatpush1.xpose.msra.mxu0 0.0
    %2246 = vmatprep.subr.mxu0 0.0
    %2247 = vmatpush1.xpose.msra.mxu0 0.0
    %2248 = vmatprep.subr.mxu0 0.0
    %2249 = vmatpush1.xpose.msra.mxu0 0.0
    %2250 = vmatprep.subr.mxu0 0.0
    %2251 = vmatpush1.xpose.msra.mxu0 0.0
    %2252 = vmatprep.subr.mxu0 0.0
    %2253 = vmatpush1.xpose.msra.mxu0 0.0
    %2254 = vmatprep.subr.mxu0 0.0
    %2255 = vmatpush1.xpose.msra.mxu0 0.0
    %2256 = vmatprep.subr.mxu0 0.0
    %2257 = vmatpush1.xpose.msra.mxu0 0.0
    %2258 = vmatprep.subr.mxu0 0.0
    %2259 = vmatpush1.xpose.msra.mxu0 0.0
    %2260 = vmatprep.subr.mxu0 0.0
    %2261 = vmatpush1.xpose.msra.mxu0 0.0
    %2262 = vmatprep.subr.mxu0 0.0
    %2263 = vmatpush1.xpose.msra.mxu0 0.0
    %2264 = vmatprep.subr.mxu0 0.0
    %2265 = vmatpush1.xpose.msra.mxu0 0.0
    %2266 = vmatprep.subr.mxu0 0.0
    %2267 = vmatpush1.xpose.msra.mxu0 0.0
    %2268 = vmatprep.subr.mxu0 0.0
    %2269 = vmatpush1.xpose.msra.mxu0 0.0
    %2270 = vmatprep.subr.mxu0 0.0
    %2271 = vmatpush1.xpose.msra.mxu0 0.0
    %2272 = vmatprep.subr.mxu0 0.0
    %2273 = vmatpush1.xpose.msra.mxu0 0.0
    %2274 = vmatprep.subr.mxu0 0.0
    %2275 = vmatpush1.xpose.msra.mxu0 0.0
    %2276 = vmatprep.subr.mxu0 0.0
    %2277 = vmatpush1.xpose.msra.mxu0 0.0
    %2278 = vmatprep.subr.mxu0 0.0
    %2279 = vmatpush1.xpose.msra.mxu0 0.0
    %2280 = vmatprep.subr.mxu0 0.0
    %2281 = vmatpush1.xpose.msra.mxu0 0.0
    %2282 = vmatprep.subr.mxu0 0.0
    %2283 = vmatpush1.xpose.msra.mxu0 0.0
    %2284 = vmatprep.subr.mxu0 0.0
    %2285 = vmatpush1.xpose.msra.mxu0 0.0
    %2286 = vmatprep.subr.mxu0 0.0
    %2287 = vmatpush1.xpose.msra.mxu0 0.0
    %2288 = vmatprep.subr.mxu0 0.0
    %2289 = vmatpush1.xpose.msra.mxu0 0.0
    %2290 = vmatprep.subr.mxu0 0.0
    %2291 = vmatpush1.xpose.msra.mxu0 0.0
    %2292 = vmatprep.subr.mxu0 0.0
    %2293 = vmatpush1.xpose.msra.mxu0 0.0
    %2294 = vmatprep.subr.mxu0 0.0
    %2295 = vmatpush1.xpose.msra.mxu0 0.0
    %2296 = vmatprep.subr.mxu0 0.0
    %2297 = vmatpush1.xpose.msra.mxu0 0.0
    %2298 = vmatprep.subr.mxu0 0.0
    %2299 = vmatpush1.xpose.msra.mxu0 0.0
    %2300 = vmatprep.subr.mxu0 0.0
    %2301 = vmatpush1.xpose.msra.mxu0 0.0
    %2302 = vmatprep.subr.mxu0 0.0
    %2303 = vmatpush1.xpose.msra.mxu0 0.0
    %2304 = vmatprep.mubr.f32.mxu0 0.0
    %2305 = vmatmul.mubr.f32.gmra.mrb[0].mxu0 %v2236
    %v2306 = vpop.f32.mrb[0].mxu0
    %v2307 = vadd.f32 %v2231, %v2306
    %v2308 = vpop.f32.mrb[0].mxu0
    %2309 = vdwg.mxu0
    %v2310 = vxor.u32 %v2307, 2147483648
    %v2311 = vmul.f32 %v2310, 1.442695
    %v2312 = vpow.pop %v2311
    %v2313 = vadd.f32 %v2312, 1.0
    %v2314 = vrcp.pop %v2313
    %v2315 = vmul.f32 1.0, %v2314
    %vm2316 = vcmask 57344
    %2317 = vst.msk [vmem:[#allocation11] sm:$0x1] %vm2316, %v2315
    // Predicated region
    $region66: #{network_forward.1} parent=1 // pred_check
      _
    $region67: #{network_forward.1} parent=1 // pred_check_branch
      %2319 = sbr.rel (0) target = $region69
    $region68: #{network_forward.1} parent=1 // pred_region
      %s2321 = ssub.s32 16, 16
      %2322 = vsyncadd [#allocation5], %s2321
      %s2324 = sshll.u32 [#allocation11], 4
      %s2325 = int_to_ptr.vmem [resolvable:$true] %s2324
      %2327 = dma.vmem_to_hbm [thread:$0]  %s2325, 16, %s12, [#allocation5]
    $region69: #{network_forward.1} parent=1 // pred_fallthru
      _
    // Predicated region
    $region70: #{network_forward.1} parent=1 // pred_check
      _
    $region71: #{network_forward.1} parent=1 // pred_check_branch
      %2329 = sbr.rel (0) target = $region73
    $region72: #{network_forward.1} parent=1 // pred_region
      %2330 = dma.done [#allocation5], 16
    $region73: #{network_forward.1} parent=1 // pred_fallthru
      _
    %2331 = vsyncpa [#allocation4], 1
    %2332 = vsyncpa [#allocation7], 1
    %2333 = vsyncpa [#allocation10], 1
    %2334 = vsyncpa [#allocation5], 1

</llo_original>
